<compile_context>
chip_gen: v7x
topology: tpu7x:2x2x1
jax: 0.10.0
libtpu: 0.0.40
codegen_flags: <defaults>
</compile_context>

<pallas_src>
import functools

import jax
import jax.numpy as jnp
from jax.experimental import pallas as pl
from jax.experimental.pallas import tpu as pltpu


def _conv_bn_gelu_kernel(x_ref, w_ref, gamma_ref, beta_ref, o_ref,
                         gram_ref, xsum_ref, scale_ref, shift_ref,
                         *, inv_count, eps):
    p = pl.program_id(0)                                   # 0: stats, 1: apply
    is_first_block = jnp.logical_and(pl.program_id(1) == 0,
                                     pl.program_id(2) == 0)

    @pl.when(p == 0)
    def _stats_pass():
        @pl.when(is_first_block)
        def _():
            gram_ref[...] = jnp.zeros_like(gram_ref)
            xsum_ref[...] = jnp.zeros_like(xsum_ref)
        x = x_ref[0]                                       # (Cin, thw)
        # Per-block stats work rides the otherwise-idle MXU (K = thw):
        gram_ref[...] += jax.lax.dot_general(
            x, x, dimension_numbers=(((1,), (1,)), ((), ())),
            preferred_element_type=jnp.float32)            # (Cin, Cin)
        xsum_ref[...] += jnp.sum(x, axis=1, keepdims=True)  # (Cin, 1)

    @pl.when(p == 1)
    def _apply_pass():
        @pl.when(is_first_block)
        def _finalize_stats():
            w = w_ref[...]                                 # (Cout, Cin)
            s1 = jnp.dot(w, xsum_ref[...],
                         preferred_element_type=jnp.float32)   # sum(y)   (Cout,1)
            wg = jnp.dot(w, gram_ref[...],
                         preferred_element_type=jnp.float32)   # (Cout, Cin)
            s2 = jnp.sum(wg * w, axis=1, keepdims=True)        # sum(y^2) (Cout,1)
            mean = s1 * inv_count
            var = s2 * inv_count - mean * mean                 # biased var (training BN)
            scale = gamma_ref[...] * jax.lax.rsqrt(var + eps)
            scale_ref[...] = scale
            shift_ref[...] = beta_ref[...] - mean * scale
        # Recompute the cheap K=Cin conv for this block, fuse BN + tanh-GELU,
        # and write the blocked output (writeback overlaps the next block).
        y = jnp.dot(w_ref[...], x_ref[0], preferred_element_type=jnp.float32)
        v2 = y * scale_ref[...] + shift_ref[...]           # (Cout, thw)
        v8 = (v2 + (v2 * v2 * v2) * 0.044715) * 0.7978845608028654
        o_ref[0] = (v2 * 0.5) * (jnp.tanh(v8) + 1.0)


def _pick_hw_tile(hw, target):
    """Largest multiple-of-128 divisor of hw that is <= target (else full hw)."""
    if hw <= target or hw % 128 != 0:
        return hw
    best = hw
    t = 128
    while t <= target:
        if hw % t == 0:
            best = t
        t += 128
    return best


def model_forward(x_nchw, conv_w, conv_b, gamma, beta, eps=1e-5,
                  hw_tile_target=2048):
    # conv_b intentionally unused: training-mode BatchNorm removes any
    # per-channel constant, so the conv bias cannot affect the output.
    # TODO(synk): BN running_mean/running_var buffer updates (module side
    # effects) are not produced; only the forward activations are returned.
    del conv_b
    N, Cin, H, W = x_nchw.shape
    Cout = conv_w.shape[0]
    HW = H * W
    thw = _pick_hw_tile(HW, hw_tile_target)
    n_hw = HW // thw

    x3 = x_nchw.reshape(N, Cin, HW)                       # HW on the lane axis
    w2 = conv_w.reshape(Cout, Cin).astype(jnp.float32)
    g2 = gamma.reshape(Cout, 1).astype(jnp.float32)
    b2 = beta.reshape(Cout, 1).astype(jnp.float32)

    kernel = functools.partial(
        _conv_bn_gelu_kernel,
        inv_count=1.0 / float(N * HW),
        eps=float(eps),
    )

    cost = pl.CostEstimate(
        flops=2 * N * HW * Cin * (Cout + Cin) + 12 * N * HW * Cout,
        transcendentals=N * HW * Cout,
        bytes_accessed=4 * (2 * N * Cin * HW + N * Cout * HW
                            + Cout * Cin + 2 * Cout),
    )

    out3 = pl.pallas_call(
        kernel,
        out_shape=jax.ShapeDtypeStruct((N, Cout, HW), jnp.float32),
        grid_spec=pltpu.PrefetchScalarGridSpec(
            num_scalar_prefetch=0,
            grid=(2, N, n_hw),
            in_specs=[
                pl.BlockSpec((1, Cin, thw), lambda p, n, h: (n, 0, h)),  # x block
                pl.BlockSpec((Cout, Cin), lambda p, n, h: (0, 0)),       # weights
                pl.BlockSpec((Cout, 1), lambda p, n, h: (0, 0)),         # gamma
                pl.BlockSpec((Cout, 1), lambda p, n, h: (0, 0)),         # beta
            ],
            # Pass 0 pins the out index at block (0,0,0) (no writes, stays
            # resident, no garbage flush); pass 1 walks the blocks so each
            # block's HBM writeback overlaps the next block's compute.
            out_specs=pl.BlockSpec((1, Cout, thw),
                                   lambda p, n, h: (p * n, 0, p * h)),
            scratch_shapes=[
                pltpu.VMEM((Cin, Cin), jnp.float32),   # Gram accumulator
                pltpu.VMEM((Cin, 1), jnp.float32),     # sum(x) accumulator
                pltpu.VMEM((Cout, 1), jnp.float32),    # BN scale
                pltpu.VMEM((Cout, 1), jnp.float32),    # BN shift
            ],
        ),
        compiler_params=pltpu.CompilerParams(
            # Stats accumulate into shared scratch -> sequential grid.
            dimension_semantics=("arbitrary", "arbitrary", "arbitrary")),
        cost_estimate=cost,
    )(x3, w2, g2, b2)

    return out3.reshape(N, Cout, H, W)                    # pure view reshape


def reference_forward(x_nchw, conv_w, conv_b, gamma, beta, eps=1e-5):
    # Pure-JAX reference of the PyTorch module semantics (bias included).
    N, Cin, H, W = x_nchw.shape
    Cout = conv_w.shape[0]
    x2d = jnp.transpose(x_nchw, (0, 2, 3, 1)).reshape(-1, Cin)
    y = x2d @ conv_w.reshape(Cout, Cin).T + conv_b
    mean = jnp.mean(y, axis=0, keepdims=True)
    var = jnp.mean((y - mean) ** 2, axis=0, keepdims=True)
    v2 = (y - mean) / jnp.sqrt(var + eps) * gamma + beta
    v11 = (v2 * 0.5) * (jnp.tanh((v2 + v2 ** 3 * 0.044715) * 0.7978845608028654) + 1.0)
    return jnp.transpose(v11.reshape(N, H, W, Cout), (0, 3, 1, 2))


if __name__ == "__main__":
    key = jax.random.PRNGKey(0)
    k_x, k_w, k_b, k_g, k_be = jax.random.split(key, 5)

    # Small shapes consistent with Conv2d(8 -> 64, 1x1): N=2, Cin=8, H=W=32.
    N, Cin, Cout, H, W = 2, 8, 64, 32, 32
    x = jax.random.normal(k_x, (N, Cin, H, W), dtype=jnp.float32)
    conv_w = jax.random.normal(k_w, (Cout, Cin, 1, 1), dtype=jnp.float32) * 0.1
    conv_b = jax.random.normal(k_b, (Cout,), dtype=jnp.float32) * 0.1
    gamma = 1.0 + 0.1 * jax.random.normal(k_g, (Cout,), dtype=jnp.float32)
    beta = 0.1 * jax.random.normal(k_be, (Cout,), dtype=jnp.float32)

    # hw_tile_target=512 -> two HW tiles per batch, exercising the streaming grid.
    fwd = jax.jit(functools.partial(model_forward, hw_tile_target=512))
    out = jax.block_until_ready(fwd(x, conv_w, conv_b, gamma, beta))

    ref = reference_forward(x, conv_w, conv_b, gamma, beta)
    assert out.shape == (N, Cout, H, W)
    assert jnp.allclose(out, ref, atol=1e-4, rtol=1e-4), "mismatch vs reference"

    print("KERNEL_OK")
</pallas_src>

<mosaic_0001>
module attributes {stable_mosaic.version = 11 : i64} {
  func.func @_conv_bn_gelu_kernel(%arg0: i32, %arg1: i32, %arg2: i32, %arg3: memref<1x8x512xf32, #tpu.memory_space<vmem>>, %arg4: memref<64x8xf32, #tpu.memory_space<vmem>>, %arg5: memref<64x1xf32, #tpu.memory_space<vmem>>, %arg6: memref<64x1xf32, #tpu.memory_space<vmem>>, %arg7: memref<1x64x512xf32, #tpu.memory_space<vmem>>, %arg8: memref<8x8xf32, #tpu.memory_space<vmem>>, %arg9: memref<8x1xf32, #tpu.memory_space<vmem>>, %arg10: memref<64x1xf32, #tpu.memory_space<vmem>>, %arg11: memref<64x1xf32, #tpu.memory_space<vmem>>) attributes {dimension_semantics = [#tpu.dimension_semantics<arbitrary>, #tpu.dimension_semantics<arbitrary>, #tpu.dimension_semantics<arbitrary>], iteration_bounds = array<i64: 2, 2, 2>, scalar_prefetch = 0 : i64, scratch_operands = 4 : i64, tpu.core_type = #tpu.core_type<tc>, window_params = [{transform_indices = @transform_0, window_bounds = array<i64: 1, 8, 512>}, {pipeline_mode = #tpu.pipeline_mode<synchronous>, transform_indices = @transform_1, window_bounds = array<i64: 64, 8>}, {pipeline_mode = #tpu.pipeline_mode<synchronous>, transform_indices = @transform_2, window_bounds = array<i64: 64, 1>}, {pipeline_mode = #tpu.pipeline_mode<synchronous>, transform_indices = @transform_3, window_bounds = array<i64: 64, 1>}, {transform_indices = @transform_4, window_bounds = array<i64: 1, 64, 512>}]} {
    %c0_i32 = arith.constant 0 : i32
    %0 = arith.cmpi eq, %arg1, %c0_i32 : i32
    %c0_i32_0 = arith.constant 0 : i32
    %1 = arith.cmpi eq, %arg2, %c0_i32_0 : i32
    %2 = arith.andi %0, %1 : i1
    %c0_i32_1 = arith.constant 0 : i32
    %3 = arith.cmpi eq, %arg0, %c0_i32_1 : i32
    %4 = arith.extui %3 : i1 to i32
    %c0_i32_2 = arith.constant 0 : i32
    %5 = arith.cmpi ne, %4, %c0_i32_2 : i32
    scf.if %5 {
      %9 = arith.extui %2 : i1 to i32
      %c0_i32_4 = arith.constant 0 : i32
      %10 = arith.cmpi ne, %9, %c0_i32_4 : i32
      scf.if %10 {
        %cst_16 = arith.constant 0.000000e+00 : f32
        %22 = vector.broadcast %cst_16 : f32 to vector<8x8xf32>
        %c0_17 = arith.constant 0 : index
        %c0_18 = arith.constant 0 : index
        %23 = vector.load %arg8[%c0_17, %c0_18] : memref<8x8xf32, #tpu.memory_space<vmem>>, vector<8x8xf32>
        tpu.vector_store %arg8[%c0_17, %c0_18], %22 {strides = array<i32>} : memref<8x8xf32, #tpu.memory_space<vmem>>, vector<8x8xf32>,
        %cst_19 = arith.constant 0.000000e+00 : f32
        %24 = vector.broadcast %cst_19 : f32 to vector<8x1xf32>
        %c0_20 = arith.constant 0 : index
        %c0_21 = arith.constant 0 : index
        %25 = vector.load %arg9[%c0_20, %c0_21] : memref<8x1xf32, #tpu.memory_space<vmem>>, vector<8x1xf32>
        tpu.vector_store %arg9[%c0_20, %c0_21], %24 {strides = array<i32>} : memref<8x1xf32, #tpu.memory_space<vmem>>, vector<8x1xf32>,
      } else {
      }
      %c0 = arith.constant 0 : index
      %c0_5 = arith.constant 0 : index
      %c0_6 = arith.constant 0 : index
      %11 = vector.load %arg3[%c0, %c0_5, %c0_6] : memref<1x8x512xf32, #tpu.memory_space<vmem>>, vector<1x8x512xf32>
      %12 = vector.shape_cast %11 : vector<1x8x512xf32> to vector<8x512xf32>
      %c0_7 = arith.constant 0 : index
      %c0_8 = arith.constant 0 : index
      %13 = vector.load %arg8[%c0_7, %c0_8] : memref<8x8xf32, #tpu.memory_space<vmem>>, vector<8x8xf32>
      %cst = arith.constant dense<0.000000e+00> : vector<8x8xf32>
      %14 = tpu.matmul %12, %12, %cst {dimension_numbers = #tpu.dot_dimension_numbers<[1], [1], [0], [0], [0, 0, 1, 0], [], []>} : vector<8x512xf32>, vector<8x512xf32>, vector<8x8xf32> -> vector<8x8xf32>
      %15 = arith.addf %13, %14 : vector<8x8xf32>
      %c0_9 = arith.constant 0 : index
      %c0_10 = arith.constant 0 : index
      %16 = vector.load %arg8[%c0_9, %c0_10] : memref<8x8xf32, #tpu.memory_space<vmem>>, vector<8x8xf32>
      tpu.vector_store %arg8[%c0_9, %c0_10], %15 {strides = array<i32>} : memref<8x8xf32, #tpu.memory_space<vmem>>, vector<8x8xf32>,
      %c0_11 = arith.constant 0 : index
      %c0_12 = arith.constant 0 : index
      %17 = vector.load %arg9[%c0_11, %c0_12] : memref<8x1xf32, #tpu.memory_space<vmem>>, vector<8x1xf32>
      %cst_13 = arith.constant dense<0.000000e+00> : vector<8xf32>
      %18 = vector.multi_reduction <add>, %12, %cst_13 [1] : vector<8x512xf32> to vector<8xf32>
      %19 = vector.shape_cast %18 : vector<8xf32> to vector<8x1xf32>
      %20 = arith.addf %17, %19 : vector<8x1xf32>
      %c0_14 = arith.constant 0 : index
      %c0_15 = arith.constant 0 : index
      %21 = vector.load %arg9[%c0_14, %c0_15] : memref<8x1xf32, #tpu.memory_space<vmem>>, vector<8x1xf32>
      tpu.vector_store %arg9[%c0_14, %c0_15], %20 {strides = array<i32>} : memref<8x1xf32, #tpu.memory_space<vmem>>, vector<8x1xf32>,
    } else {
    }
    %c1_i32 = arith.constant 1 : i32
    %6 = arith.cmpi eq, %arg0, %c1_i32 : i32
    %7 = arith.extui %6 : i1 to i32
    %c0_i32_3 = arith.constant 0 : i32
    %8 = arith.cmpi ne, %7, %c0_i32_3 : i32
    scf.if %8 {
      %9 = arith.extui %2 : i1 to i32
      %c0_i32_4 = arith.constant 0 : i32
      %10 = arith.cmpi ne, %9, %c0_i32_4 : i32
      scf.if %10 {
        %c0_20 = arith.constant 0 : index
        %c0_21 = arith.constant 0 : index
        %37 = vector.load %arg4[%c0_20, %c0_21] : memref<64x8xf32, #tpu.memory_space<vmem>>, vector<64x8xf32>
        %c0_22 = arith.constant 0 : index
        %c0_23 = arith.constant 0 : index
        %38 = vector.load %arg9[%c0_22, %c0_23] : memref<8x1xf32, #tpu.memory_space<vmem>>, vector<8x1xf32>
        %cst_24 = arith.constant dense<0.000000e+00> : vector<64x1xf32>
        %39 = tpu.matmul %37, %38, %cst_24 {dimension_numbers = #tpu.dot_dimension_numbers<[1], [0], [0], [1], [0, 0, 1, 1], [], []>} : vector<64x8xf32>, vector<8x1xf32>, vector<64x1xf32> -> vector<64x1xf32>
        %c0_25 = arith.constant 0 : index
        %c0_26 = arith.constant 0 : index
        %40 = vector.load %arg8[%c0_25, %c0_26] : memref<8x8xf32, #tpu.memory_space<vmem>>, vector<8x8xf32>
        %cst_27 = arith.constant dense<0.000000e+00> : vector<64x8xf32>
        %41 = tpu.matmul %37, %40, %cst_27 {dimension_numbers = #tpu.dot_dimension_numbers<[1], [0], [0], [1], [0, 0, 1, 1], [], []>} : vector<64x8xf32>, vector<8x8xf32>, vector<64x8xf32> -> vector<64x8xf32>
        %42 = arith.mulf %41, %37 : vector<64x8xf32>
        %cst_28 = arith.constant dense<0.000000e+00> : vector<64xf32>
        %43 = vector.multi_reduction <add>, %42, %cst_28 [1] : vector<64x8xf32> to vector<64xf32>
        %44 = vector.shape_cast %43 : vector<64xf32> to vector<64x1xf32>
        %cst_29 = arith.constant 4.8828125E-4 : f32
        %45 = vector.broadcast %cst_29 : f32 to vector<64x1xf32>
        %46 = arith.mulf %39, %45 : vector<64x1xf32>
        %cst_30 = arith.constant 4.8828125E-4 : f32
        %47 = vector.broadcast %cst_30 : f32 to vector<64x1xf32>
        %48 = arith.mulf %44, %47 : vector<64x1xf32>
        %49 = arith.mulf %46, %46 : vector<64x1xf32>
        %50 = arith.subf %48, %49 : vector<64x1xf32>
        %c0_31 = arith.constant 0 : index
        %c0_32 = arith.constant 0 : index
        %51 = vector.load %arg5[%c0_31, %c0_32] : memref<64x1xf32, #tpu.memory_space<vmem>>, vector<64x1xf32>
        %cst_33 = arith.constant 9.99999974E-6 : f32
        %52 = vector.broadcast %cst_33 : f32 to vector<64x1xf32>
        %53 = arith.addf %50, %52 : vector<64x1xf32>
        %54 = math.rsqrt %53 : vector<64x1xf32>
        %55 = arith.mulf %51, %54 : vector<64x1xf32>
        %c0_34 = arith.constant 0 : index
        %c0_35 = arith.constant 0 : index
        %56 = vector.load %arg10[%c0_34, %c0_35] : memref<64x1xf32, #tpu.memory_space<vmem>>, vector<64x1xf32>
        tpu.vector_store %arg10[%c0_34, %c0_35], %55 {strides = array<i32>} : memref<64x1xf32, #tpu.memory_space<vmem>>, vector<64x1xf32>,
        %c0_36 = arith.constant 0 : index
        %c0_37 = arith.constant 0 : index
        %57 = vector.load %arg6[%c0_36, %c0_37] : memref<64x1xf32, #tpu.memory_space<vmem>>, vector<64x1xf32>
        %58 = arith.mulf %46, %55 : vector<64x1xf32>
        %59 = arith.subf %57, %58 : vector<64x1xf32>
        %c0_38 = arith.constant 0 : index
        %c0_39 = arith.constant 0 : index
        %60 = vector.load %arg11[%c0_38, %c0_39] : memref<64x1xf32, #tpu.memory_space<vmem>>, vector<64x1xf32>
        tpu.vector_store %arg11[%c0_38, %c0_39], %59 {strides = array<i32>} : memref<64x1xf32, #tpu.memory_space<vmem>>, vector<64x1xf32>,
      } else {
      }
      %c0 = arith.constant 0 : index
      %c0_5 = arith.constant 0 : index
      %11 = vector.load %arg4[%c0, %c0_5] : memref<64x8xf32, #tpu.memory_space<vmem>>, vector<64x8xf32>
      %c0_6 = arith.constant 0 : index
      %c0_7 = arith.constant 0 : index
      %c0_8 = arith.constant 0 : index
      %12 = vector.load %arg3[%c0_6, %c0_7, %c0_8] : memref<1x8x512xf32, #tpu.memory_space<vmem>>, vector<1x8x512xf32>
      %13 = vector.shape_cast %12 : vector<1x8x512xf32> to vector<8x512xf32>
      %cst = arith.constant dense<0.000000e+00> : vector<64x512xf32>
      %14 = tpu.matmul %11, %13, %cst {dimension_numbers = #tpu.dot_dimension_numbers<[1], [0], [0], [1], [0, 0, 1, 1], [], []>} : vector<64x8xf32>, vector<8x512xf32>, vector<64x512xf32> -> vector<64x512xf32>
      %c0_9 = arith.constant 0 : index
      %c0_10 = arith.constant 0 : index
      %15 = vector.load %arg10[%c0_9, %c0_10] : memref<64x1xf32, #tpu.memory_space<vmem>>, vector<64x1xf32>
      %16 = vector.broadcast %15 : vector<64x1xf32> to vector<64x512xf32>
      %17 = arith.mulf %14, %16 : vector<64x512xf32>
      %c0_11 = arith.constant 0 : index
      %c0_12 = arith.constant 0 : index
      %18 = vector.load %arg11[%c0_11, %c0_12] : memref<64x1xf32, #tpu.memory_space<vmem>>, vector<64x1xf32>
      %19 = vector.broadcast %18 : vector<64x1xf32> to vector<64x512xf32>
      %20 = arith.addf %17, %19 : vector<64x512xf32>
      %21 = arith.mulf %20, %20 : vector<64x512xf32>
      %22 = arith.mulf %21, %20 : vector<64x512xf32>
      %cst_13 = arith.constant 4.471500e-02 : f32
      %23 = vector.broadcast %cst_13 : f32 to vector<64x512xf32>
      %24 = arith.mulf %22, %23 : vector<64x512xf32>
      %25 = arith.addf %20, %24 : vector<64x512xf32>
      %cst_14 = arith.constant 0.797884583 : f32
      %26 = vector.broadcast %cst_14 : f32 to vector<64x512xf32>
      %27 = arith.mulf %25, %26 : vector<64x512xf32>
      %cst_15 = arith.constant 5.000000e-01 : f32
      %28 = vector.broadcast %cst_15 : f32 to vector<64x512xf32>
      %29 = arith.mulf %20, %28 : vector<64x512xf32>
      %30 = math.tanh %27 : vector<64x512xf32>
      %cst_16 = arith.constant 1.000000e+00 : f32
      %31 = vector.broadcast %cst_16 : f32 to vector<64x512xf32>
      %32 = arith.addf %30, %31 : vector<64x512xf32>
      %33 = arith.mulf %29, %32 : vector<64x512xf32>
      %c0_17 = arith.constant 0 : index
      %c0_18 = arith.constant 0 : index
      %c0_19 = arith.constant 0 : index
      %34 = vector.load %arg7[%c0_17, %c0_18, %c0_19] : memref<1x64x512xf32, #tpu.memory_space<vmem>>, vector<1x64x512xf32>
      %35 = vector.shape_cast %34 : vector<1x64x512xf32> to vector<64x512xf32>
      %36 = vector.shape_cast %33 : vector<64x512xf32> to vector<1x64x512xf32>
      tpu.vector_store %arg7[%c0_17, %c0_18, %c0_19], %36 {strides = array<i32>} : memref<1x64x512xf32, #tpu.memory_space<vmem>>, vector<1x64x512xf32>,
    } else {
    }
    return
  }
  func.func @transform_0(%arg0: i32, %arg1: i32, %arg2: i32) -> (i32, i32, i32) {
    %c0_i32 = arith.constant 0 : i32
    %c0_i32_0 = arith.constant 0 : i32
    return %arg1, %c0_i32, %arg2 : i32, i32, i32
  }
  func.func @transform_1(%arg0: i32, %arg1: i32, %arg2: i32) -> (i32, i32) {
    %c0_i32 = arith.constant 0 : i32
    %c0_i32_0 = arith.constant 0 : i32
    %c0_i32_1 = arith.constant 0 : i32
    return %c0_i32, %c0_i32_0 : i32, i32
  }
  func.func @transform_2(%arg0: i32, %arg1: i32, %arg2: i32) -> (i32, i32) {
    %c0_i32 = arith.constant 0 : i32
    %c0_i32_0 = arith.constant 0 : i32
    %c0_i32_1 = arith.constant 0 : i32
    return %c0_i32, %c0_i32_0 : i32, i32
  }
  func.func @transform_3(%arg0: i32, %arg1: i32, %arg2: i32) -> (i32, i32) {
    %c0_i32 = arith.constant 0 : i32
    %c0_i32_0 = arith.constant 0 : i32
    %c0_i32_1 = arith.constant 0 : i32
    return %c0_i32, %c0_i32_0 : i32, i32
  }
  func.func @transform_4(%arg0: i32, %arg1: i32, %arg2: i32) -> (i32, i32, i32) {
    %0 = arith.muli %arg0, %arg1 : i32
    %1 = arith.muli %arg0, %arg2 : i32
    %c0_i32 = arith.constant 0 : i32
    %c0_i32_0 = arith.constant 0 : i32
    return %0, %c0_i32, %1 : i32, i32, i32
  }
}

</mosaic_0001>

<llo_original>
// kernel: model_forward.1
$region0: #{model_forward.1}
  #allocation0 [shape = 'u32[]', space=smem, size = 0x4, offset = 0x4, fixed_abs, tag = 'smem constant byte address 0x4 - core index']
  #allocation1 [shape = 'u32[144,128]{1,0:T(1,128)}', space=vmem, size = 0x12000, scoped, tag = 'internal scratch']
  #allocation2 [shape = 'f32[8,8]{1,0:T(8,128)}', space=vmem, size = 0x1000, scoped, tag = 'scratch operand']
  #allocation3 [shape = 'f32[8,1]{1,0:T(8,128)}', space=vmem, size = 0x1000, scoped, tag = 'scratch operand']
  #allocation4 [shape = 'f32[64,1]{1,0:T(8,128)}', space=vmem, size = 0x8000, scoped, tag = 'scratch operand']
  #allocation5 [shape = 'f32[64,1]{1,0:T(8,128)}', space=vmem, size = 0x8000, scoped, tag = 'scratch operand']
  %s0 = inlined_call_operand.vmem [shape: f32[2,8,1024], index: 0, kind: input, shape index: {}]
  %s1 = inlined_call_operand.vmem [shape: f32[64,8], index: 1, kind: input, shape index: {}]
  %s2 = inlined_call_operand.vmem [shape: f32[64,1], index: 2, kind: input, shape index: {}]
  %s3 = inlined_call_operand.vmem [shape: f32[64,1], index: 3, kind: input, shape index: {}]
  %s4 = inlined_call_operand.vmem [shape: f32[2,64,1024], index: 4, kind: output, shape index: {}]
  %s5 = sld [smem:[#allocation0]]
  $region84: #{model_forward.1} parent=0
    _
  %s7 = ssub.s32 1, %s5
  %s8 = scalar_select 0, %s7, %s5
  $region1: #{model_forward.1} parent=0
    #allocation6 [shape = 'u8[262144]{0}', space=vmem, size = 0x40000, scoped, tag = 'output window, operand 0']
    loop: start=0, step=1, limit=10
    $region2: #{model_forward.1} parent=1 // loop_pre_header
      _
    $region3: #{model_forward.1} parent=1 // loop_header
      %s10 = sphi 0, %s14
      %p11 = scmp.ge.s32.totalorder %s10, 10
      %s17 = sphi 0, %s36
      %s18 = sphi 0, %s32
      %s19 = sphi 0, %s28
      %s20 = sphi 0, %s17
      %s21 = sphi 0, %s18
      %s22 = sphi 0, %s19
      %s23 = sphi 0, %s20
      %s24 = sphi 0, %s21
      %s25 = sphi 0, %s22
      %s41 = sphi 0, %s43
      %s44 = sphi 0, %s41
      %s45 = sphi 0, %s44
      %s61 = sphi 0, %s45
      %s65 = sphi 0, %s65
      %s67 = sphi 0, %s65
      %s68 = sphi 0, %s67
      %s82 = sphi 0, %s68
      %s86 = sphi 0, %s86
      %s88 = sphi 0, %s86
      %s89 = sphi 0, %s88
      %s103 = sphi 0, %s89
      %s107 = sphi 0, %s107
      %s109 = sphi 0, %s107
      %s110 = sphi 0, %s109
      %s124 = sphi 0, %s110
      %s136 = sphi 0, %s138
      %s139 = sphi 0, %s136
      %s140 = sphi 0, %s139
      %s156 = sphi 0, %s140
    $region4: #{model_forward.1} parent=1 // loop_header_branch
      %13 = sbr.rel (%p11) target = $region8
    $region5: #{model_forward.1} parent=1 // loop_body
      %s15 = ssub.s32 %s10, 1
      %s16 = ssub.s32 %s10, 2
      %s26 = sadd.s32 1, %s19
      %p27 = scmp.ge.s32.totalorder %s26, 2
      %s28 = scalar_select %p27, 0, %s26
      %s29 = sadd.s32 1, %s18
      %s30 = scalar_select %p27, %s29, %s18
      %p31 = scmp.ge.s32.totalorder %s30, 2
      %s32 = scalar_select %p31, 0, %s30
      %s33 = sadd.s32 1, %s17
      %s34 = scalar_select %p31, %s33, %s17
      %p35 = scmp.ge.s32.totalorder %s34, 2
      %s36 = scalar_select %p35, 0, %s34
      %s37 = ssub.s32 %s18, %s32
      %s38 = ssub.s32 %s19, %s28
      %s39 = sor.u32 %s37, %s38
      %p40 = scmp.eq.s32.totalorder %s39, 0
      %s42 = sadd.s32 %s41, 1
      %s43 = scalar_select %p40, %s41, %s42
      %p46 = pneg %p40
      %p47 = scmp.eq.s32.totalorder %s10, 7
      %p48 = por %p46, %p47
      %p49 = scmp.ne.s32.totalorder %s41, %s44
      %p50 = scmp.eq.s32.totalorder %s10, 0
      %p51 = por %p49, %p50
      %p52 = scmp.ne.s32.totalorder %s41, %s44
      %p53 = scmp.eq.s32.totalorder %s15, 7
      %p54 = por %p52, %p53
      %p55 = scmp.ne.s32.totalorder %s44, %s45
      %p56 = scmp.eq.s32.totalorder %s15, 0
      %p57 = por %p55, %p56
      %p58 = scmp.ne.s32.totalorder %s44, %s45
      %p59 = scmp.eq.s32.totalorder %s16, 7
      %p60 = por %p58, %p59
      %p62 = scmp.ne.s32.totalorder %s45, %s61
      %p63 = scmp.eq.s32.totalorder %s16, 0
      %p64 = por %p62, %p63
      %s66 = sadd.s32 %s65, 1
      %p69 = scmp.eq.s32.totalorder %s10, 7
      %p70 = scmp.ne.s32.totalorder %s65, %s67
      %p71 = scmp.eq.s32.totalorder %s10, 0
      %p72 = por %p70, %p71
      %p73 = scmp.ne.s32.totalorder %s65, %s67
      %p74 = scmp.eq.s32.totalorder %s15, 7
      %p75 = por %p73, %p74
      %p76 = scmp.ne.s32.totalorder %s67, %s68
      %p77 = scmp.eq.s32.totalorder %s15, 0
      %p78 = por %p76, %p77
      %p79 = scmp.ne.s32.totalorder %s67, %s68
      %p80 = scmp.eq.s32.totalorder %s16, 7
      %p81 = por %p79, %p80
      %p83 = scmp.ne.s32.totalorder %s68, %s82
      %p84 = scmp.eq.s32.totalorder %s16, 0
      %p85 = por %p83, %p84
      %s87 = sadd.s32 %s86, 1
      %p90 = scmp.eq.s32.totalorder %s10, 7
      %p91 = scmp.ne.s32.totalorder %s86, %s88
      %p92 = scmp.eq.s32.totalorder %s10, 0
      %p93 = por %p91, %p92
      %p94 = scmp.ne.s32.totalorder %s86, %s88
      %p95 = scmp.eq.s32.totalorder %s15, 7
      %p96 = por %p94, %p95
      %p97 = scmp.ne.s32.totalorder %s88, %s89
      %p98 = scmp.eq.s32.totalorder %s15, 0
      %p99 = por %p97, %p98
      %p100 = scmp.ne.s32.totalorder %s88, %s89
      %p101 = scmp.eq.s32.totalorder %s16, 7
      %p102 = por %p100, %p101
      %p104 = scmp.ne.s32.totalorder %s89, %s103
      %p105 = scmp.eq.s32.totalorder %s16, 0
      %p106 = por %p104, %p105
      %s108 = sadd.s32 %s107, 1
      %p111 = scmp.eq.s32.totalorder %s10, 7
      %p112 = scmp.ne.s32.totalorder %s107, %s109
      %p113 = scmp.eq.s32.totalorder %s10, 0
      %p114 = por %p112, %p113
      %p115 = scmp.ne.s32.totalorder %s107, %s109
      %p116 = scmp.eq.s32.totalorder %s15, 7
      %p117 = por %p115, %p116
      %p118 = scmp.ne.s32.totalorder %s109, %s110
      %p119 = scmp.eq.s32.totalorder %s15, 0
      %p120 = por %p118, %p119
      %p121 = scmp.ne.s32.totalorder %s109, %s110
      %p122 = scmp.eq.s32.totalorder %s16, 7
      %p123 = por %p121, %p122
      %p125 = scmp.ne.s32.totalorder %s110, %s124
      %p126 = scmp.eq.s32.totalorder %s16, 0
      %p127 = por %p125, %p126
      %s128 = smul.u32 %s17, %s18
      %s129 = smul.u32 %s17, %s19
      %s130 = smul.u32 %s36, %s32
      %s131 = smul.u32 %s36, %s28
      %s132 = ssub.s32 %s128, %s130
      %s133 = ssub.s32 %s129, %s131
      %s134 = sor.u32 %s132, %s133
      %p135 = scmp.eq.s32.totalorder %s134, 0
      %s137 = sadd.s32 %s136, 1
      %s138 = scalar_select %p135, %s136, %s137
      %p141 = pneg %p135
      %p142 = scmp.eq.s32.totalorder %s10, 7
      %p143 = por %p141, %p142
      %p144 = scmp.ne.s32.totalorder %s136, %s139
      %p145 = scmp.eq.s32.totalorder %s10, 0
      %p146 = por %p144, %p145
      %p147 = scmp.ne.s32.totalorder %s136, %s139
      %p148 = scmp.eq.s32.totalorder %s15, 7
      %p149 = por %p147, %p148
      %p150 = scmp.ne.s32.totalorder %s139, %s140
      %p151 = scmp.eq.s32.totalorder %s15, 0
      %p152 = por %p150, %p151
      %p153 = scmp.ne.s32.totalorder %s139, %s140
      %p154 = scmp.eq.s32.totalorder %s16, 7
      %p155 = por %p153, %p154
      %p157 = scmp.ne.s32.totalorder %s140, %s156
      %p158 = scmp.eq.s32.totalorder %s16, 0
      %p159 = por %p157, %p158
      %p160 = scmp.le.s32.totalorder 1, %s10
      %p161 = scmp.lt.s32.totalorder %s10, 9
      %p162 = pnand %p160, %p161
      %p163 = pneg %p162
      // Predicated region
      $region9: #{model_forward.1} parent=5 // pred_check
        _
      $region10: #{model_forward.1} parent=5 // pred_check_branch
        %165 = sbr.rel (%p162) target = $region12
      $region11: #{model_forward.1} parent=5 // pred_region
        %s166 = ssub.s32 %s10, 1
        // Predicated region
        $region13: #{model_forward.1} parent=11 // pred_check
          %p167 = pneg %p78
        $region14: #{model_forward.1} parent=11 // pred_check_branch
          %169 = sbr.rel (%p167) target = $region16
        $region15: #{model_forward.1} parent=11 // pred_region
          _
        $region16: #{model_forward.1} parent=11 // pred_fallthru
          _
        // Predicated region
        $region17: #{model_forward.1} parent=11 // pred_check
          %p170 = pneg %p99
        $region18: #{model_forward.1} parent=11 // pred_check_branch
          %172 = sbr.rel (%p170) target = $region20
        $region19: #{model_forward.1} parent=11 // pred_region
          _
        $region20: #{model_forward.1} parent=11 // pred_fallthru
          _
        // Predicated region
        $region21: #{model_forward.1} parent=11 // pred_check
          %p173 = pneg %p120
        $region22: #{model_forward.1} parent=11 // pred_check_branch
          %175 = sbr.rel (%p173) target = $region24
        $region23: #{model_forward.1} parent=11 // pred_region
          _
        $region24: #{model_forward.1} parent=11 // pred_fallthru
          _
      $region12: #{model_forward.1} parent=5 // pred_fallthru
        _
      %p176 = scmp.lt.s32.totalorder %s10, 8
      // Predicated region
      $region25: #{model_forward.1} parent=5 // pred_check
        %p177 = pneg %p176
      $region26: #{model_forward.1} parent=5 // pred_check_branch
        %179 = sbr.rel (%p177) target = $region28
      $region27: #{model_forward.1} parent=5 // pred_region
        // Predicated region
        $region29: #{model_forward.1} parent=27 // pred_check
          %p180 = pneg %p51
        $region30: #{model_forward.1} parent=27 // pred_check_branch
          %182 = sbr.rel (%p180) target = $region32
        $region31: #{model_forward.1} parent=27 // pred_region
          %s183 = smul.u32 4, %s19
          %p184 = scmp.lt.s32.totalorder %s18, 1
          %s185 = scalar_select %p184, %s18, 1
          %p186 = scmp.lt.s32.totalorder %s183, 7
          %s187 = scalar_select %p186, %s183, 7
          %s188 = smul.addr %s185, 8
          %s189 = sadd.s32 %s187, %s188
          %s190 = smul.addr %s189, 8
          %s191 = scalar_lea.vmem %s0, %s190
          %s192 = smul.u32 4, %s19
        $region32: #{model_forward.1} parent=27 // pred_fallthru
          _
      $region28: #{model_forward.1} parent=5 // pred_fallthru
        _
      %p193 = scmp.le.s32.totalorder 1, %s10
      %p194 = scmp.lt.s32.totalorder %s10, 9
      %p195 = pnand %p193, %p194
      %p196 = pneg %p195
      // Predicated region
      $region33: #{model_forward.1} parent=5 // pred_check
        _
      $region34: #{model_forward.1} parent=5 // pred_check_branch
        %198 = sbr.rel (%p195) target = $region36
      $region35: #{model_forward.1} parent=5 // pred_region
        %s199 = ssub.s32 %s10, 1
        %s200 = smul.u32 4, %s22
        %p201 = scmp.lt.s32.totalorder %s21, 1
        %s202 = scalar_select %p201, %s21, 1
        %p203 = scmp.lt.s32.totalorder %s200, 7
        %s204 = scalar_select %p203, %s200, 7
        %s205 = smul.addr %s202, 8
        %s206 = sadd.s32 %s204, %s205
        %s207 = smul.addr %s206, 8
        %s208 = scalar_lea.vmem %s0, %s207
        %p209 = pneg %p57
        %p210 = pneg %p54
        %p211 = pneg %p78
        %p212 = pneg %p75
        %p213 = pneg %p99
        %p214 = pneg %p96
        %p215 = pneg %p120
        %p216 = pneg %p117
        %p217 = pneg %p152
        %p218 = pneg %p149
        %s219 = sand.u32 %s139, 1
        %s220 = sand.u32 %s139, 1
        %s221 = smul.addr %s220, 256
        %s222 = scalar_lea.vmem [#allocation6], %s221
        %s223 = smul.u32 4, %s22
        %p224 = scmp.lt.s32.totalorder %s21, 1
        %s225 = scalar_select %p224, %s21, 1
        %p226 = scmp.lt.s32.totalorder %s223, 7
        %s227 = scalar_select %p226, %s223, 7
        %s228 = smul.addr %s225, 8
        %s229 = sadd.s32 %s227, %s228
        %s230 = smul.addr %s229, 8
        %s231 = scalar_lea.vmem %s0, %s230
        %s232 = smul.u32 4, %s22
        %s233 = smul.u32 %s20, %s21
        %s234 = smul.u32 %s20, %s22
        %s235 = smul.u32 4, %s234
        %p236 = scmp.eq.s32.totalorder %s21, 0
        %p237 = scmp.eq.s32.totalorder %s22, 0
        %p238 = pnand %p236, %p237
        %p239 = pneg %p238
        %p240 = scmp.eq.s32.totalorder %s20, 0
        // Predicated region
        $region37: #{model_forward.1} parent=35 // pred_check
          %p241 = pneg %p240
        $region38: #{model_forward.1} parent=35 // pred_check_branch
          %243 = sbr.rel (%p241) target = $region40
        $region39: #{model_forward.1} parent=35 // pred_region
          // Predicated region
          $region41: #{model_forward.1} parent=39 // pred_check
            _
          $region42: #{model_forward.1} parent=39 // pred_check_branch
            %245 = sbr.rel (%p238) target = $region44
          $region43: #{model_forward.1} parent=39 // pred_region
            %vm246 = vcmask 64512
            %247 = vst.msk [vmem:[#allocation2] sm:$0xff] %vm246, 0.0
            %vm248 = vcmask 7168
            %249 = vst.msk [vmem:[#allocation3] sm:$0xff] %vm248, 0.0
          $region44: #{model_forward.1} parent=39 // pred_fallthru
            _
          %v250 = vld [vmem:[%s231] sm:$0xff]
          %v251 = vld [vmem:[%s231 + $0x8] sm:$0xff]
          %v252 = vld [vmem:[%s231 + $0x10] sm:$0xff]
          %v253 = vld [vmem:[%s231 + $0x18] sm:$0xff]
          %v254 = vld [vmem:[#allocation2] sm:$0xff]
          %255 = vmatprep.subr.mxu0 %v251
          %256 = vmatpush1.xpose.msra.mxu0 %v250
          %257 = vmatprep.subr.mxu0 0.0
          %258 = vmatpush1.xpose.msra.mxu0 0.0
          %259 = vmatprep.subr.mxu0 0.0
          %260 = vmatpush1.xpose.msra.mxu0 0.0
          %261 = vmatprep.subr.mxu0 0.0
          %262 = vmatpush1.xpose.msra.mxu0 0.0
          %263 = vmatprep.subr.mxu0 0.0
          %264 = vmatpush1.xpose.msra.mxu0 0.0
          %265 = vmatprep.subr.mxu0 0.0
          %266 = vmatpush1.xpose.msra.mxu0 0.0
          %267 = vmatprep.subr.mxu0 0.0
          %268 = vmatpush1.xpose.msra.mxu0 0.0
          %269 = vmatprep.subr.mxu0 0.0
          %270 = vmatpush1.xpose.msra.mxu0 0.0
          %271 = vmatprep.subr.mxu0 0.0
          %272 = vmatpush1.xpose.msra.mxu0 0.0
          %273 = vmatprep.subr.mxu0 0.0
          %274 = vmatpush1.xpose.msra.mxu0 0.0
          %275 = vmatprep.subr.mxu0 0.0
          %276 = vmatpush1.xpose.msra.mxu0 0.0
          %277 = vmatprep.subr.mxu0 0.0
          %278 = vmatpush1.xpose.msra.mxu0 0.0
          %279 = vmatprep.subr.mxu0 0.0
          %280 = vmatpush1.xpose.msra.mxu0 0.0
          %281 = vmatprep.subr.mxu0 0.0
          %282 = vmatpush1.xpose.msra.mxu0 0.0
          %283 = vmatprep.subr.mxu0 0.0
          %284 = vmatpush1.xpose.msra.mxu0 0.0
          %285 = vmatprep.subr.mxu0 0.0
          %286 = vmatpush1.xpose.msra.mxu0 0.0
          %287 = vmatprep.subr.mxu0 0.0
          %288 = vmatpush1.xpose.msra.mxu0 0.0
          %289 = vmatprep.subr.mxu0 0.0
          %290 = vmatpush1.xpose.msra.mxu0 0.0
          %291 = vmatprep.subr.mxu0 0.0
          %292 = vmatpush1.xpose.msra.mxu0 0.0
          %293 = vmatprep.subr.mxu0 0.0
          %294 = vmatpush1.xpose.msra.mxu0 0.0
          %295 = vmatprep.subr.mxu0 0.0
          %296 = vmatpush1.xpose.msra.mxu0 0.0
          %297 = vmatprep.subr.mxu0 0.0
          %298 = vmatpush1.xpose.msra.mxu0 0.0
          %299 = vmatprep.subr.mxu0 0.0
          %300 = vmatpush1.xpose.msra.mxu0 0.0
          %301 = vmatprep.subr.mxu0 0.0
          %302 = vmatpush1.xpose.msra.mxu0 0.0
          %303 = vmatprep.subr.mxu0 0.0
          %304 = vmatpush1.xpose.msra.mxu0 0.0
          %305 = vmatprep.subr.mxu0 0.0
          %306 = vmatpush1.xpose.msra.mxu0 0.0
          %307 = vmatprep.subr.mxu0 0.0
          %308 = vmatpush1.xpose.msra.mxu0 0.0
          %309 = vmatprep.subr.mxu0 0.0
          %310 = vmatpush1.xpose.msra.mxu0 0.0
          %311 = vmatprep.subr.mxu0 0.0
          %312 = vmatpush1.xpose.msra.mxu0 0.0
          %313 = vmatprep.subr.mxu0 0.0
          %314 = vmatpush1.xpose.msra.mxu0 0.0
          %315 = vmatprep.subr.mxu0 0.0
          %316 = vmatpush1.xpose.msra.mxu0 0.0
          %317 = vmatprep.subr.mxu0 0.0
          %318 = vmatpush1.xpose.msra.mxu0 0.0
          %319 = vmatprep.mubr.f32.mxu0 %v251
          %320 = vmatmul.mubr.f32.gmra.mrb[0].mxu0 %v250
          %v321 = vpop.f32.mrb[0].mxu0
          %v322 = vadd.f32 0.0, %v321
          %v323 = vpop.f32.mrb[0].mxu0
          %324 = vdwg.mxu0
          %325 = vmatprep.subr.mxu0 %v253
          %326 = vmatpush1.xpose.msra.mxu0 %v252
          %327 = vmatprep.subr.mxu0 0.0
          %328 = vmatpush1.xpose.msra.mxu0 0.0
          %329 = vmatprep.subr.mxu0 0.0
          %330 = vmatpush1.xpose.msra.mxu0 0.0
          %331 = vmatprep.subr.mxu0 0.0
          %332 = vmatpush1.xpose.msra.mxu0 0.0
          %333 = vmatprep.subr.mxu0 0.0
          %334 = vmatpush1.xpose.msra.mxu0 0.0
          %335 = vmatprep.subr.mxu0 0.0
          %336 = vmatpush1.xpose.msra.mxu0 0.0
          %337 = vmatprep.subr.mxu0 0.0
          %338 = vmatpush1.xpose.msra.mxu0 0.0
          %339 = vmatprep.subr.mxu0 0.0
          %340 = vmatpush1.xpose.msra.mxu0 0.0
          %341 = vmatprep.subr.mxu0 0.0
          %342 = vmatpush1.xpose.msra.mxu0 0.0
          %343 = vmatprep.subr.mxu0 0.0
          %344 = vmatpush1.xpose.msra.mxu0 0.0
          %345 = vmatprep.subr.mxu0 0.0
          %346 = vmatpush1.xpose.msra.mxu0 0.0
          %347 = vmatprep.subr.mxu0 0.0
          %348 = vmatpush1.xpose.msra.mxu0 0.0
          %349 = vmatprep.subr.mxu0 0.0
          %350 = vmatpush1.xpose.msra.mxu0 0.0
          %351 = vmatprep.subr.mxu0 0.0
          %352 = vmatpush1.xpose.msra.mxu0 0.0
          %353 = vmatprep.subr.mxu0 0.0
          %354 = vmatpush1.xpose.msra.mxu0 0.0
          %355 = vmatprep.subr.mxu0 0.0
          %356 = vmatpush1.xpose.msra.mxu0 0.0
          %357 = vmatprep.subr.mxu0 0.0
          %358 = vmatpush1.xpose.msra.mxu0 0.0
          %359 = vmatprep.subr.mxu0 0.0
          %360 = vmatpush1.xpose.msra.mxu0 0.0
          %361 = vmatprep.subr.mxu0 0.0
          %362 = vmatpush1.xpose.msra.mxu0 0.0
          %363 = vmatprep.subr.mxu0 0.0
          %364 = vmatpush1.xpose.msra.mxu0 0.0
          %365 = vmatprep.subr.mxu0 0.0
          %366 = vmatpush1.xpose.msra.mxu0 0.0
          %367 = vmatprep.subr.mxu0 0.0
          %368 = vmatpush1.xpose.msra.mxu0 0.0
          %369 = vmatprep.subr.mxu0 0.0
          %370 = vmatpush1.xpose.msra.mxu0 0.0
          %371 = vmatprep.subr.mxu0 0.0
          %372 = vmatpush1.xpose.msra.mxu0 0.0
          %373 = vmatprep.subr.mxu0 0.0
          %374 = vmatpush1.xpose.msra.mxu0 0.0
          %375 = vmatprep.subr.mxu0 0.0
          %376 = vmatpush1.xpose.msra.mxu0 0.0
          %377 = vmatprep.subr.mxu0 0.0
          %378 = vmatpush1.xpose.msra.mxu0 0.0
          %379 = vmatprep.subr.mxu0 0.0
          %380 = vmatpush1.xpose.msra.mxu0 0.0
          %381 = vmatprep.subr.mxu0 0.0
          %382 = vmatpush1.xpose.msra.mxu0 0.0
          %383 = vmatprep.subr.mxu0 0.0
          %384 = vmatpush1.xpose.msra.mxu0 0.0
          %385 = vmatprep.subr.mxu0 0.0
          %386 = vmatpush1.xpose.msra.mxu0 0.0
          %387 = vmatprep.subr.mxu0 0.0
          %388 = vmatpush1.xpose.msra.mxu0 0.0
          %389 = vmatprep.mubr.f32.mxu0 %v253
          %390 = vmatmul.mubr.f32.gmra.mrb[0].mxu0 %v252
          %v391 = vpop.f32.mrb[0].mxu0
          %v392 = vadd.f32 %v322, %v391
          %v393 = vpop.f32.mrb[0].mxu0
          %394 = vdwg.mxu0
          %v395 = vadd.f32 %v254, %v392
          %vm396 = vcmask 64512
          %397 = vst.msk [vmem:[#allocation2] sm:$0xff] %vm396, %v395
          %v398 = vld [vmem:[#allocation3] sm:$0xff]
          %v399 = vadd.f32 %v250, %v251
          %v400 = vadd.f32 %v399, %v252
          %v401 = vadd.f32 %v400, %v253
          %402 = vadd.xlane.f32.xlu0 %v401
          %v403 = vpop.xlane.xlu0 %402
          %v404 = vadd.f32 %v398, %v403
          %vm405 = vcmask 7168
          %406 = vst.msk [vmem:[#allocation3] sm:$0xff] %vm405, %v404
        $region40: #{model_forward.1} parent=35 // pred_fallthru
          _
        %p407 = scmp.eq.s32.totalorder %s20, 1
        // Predicated region
        $region45: #{model_forward.1} parent=35 // pred_check
          %p408 = pneg %p407
        $region46: #{model_forward.1} parent=35 // pred_check_branch
          %410 = sbr.rel (%p408) target = $region48
        $region47: #{model_forward.1} parent=35 // pred_region
          // Predicated region
          $region49: #{model_forward.1} parent=47 // pred_check
            _
          $region50: #{model_forward.1} parent=47 // pred_check_branch
            %412 = sbr.rel (%p238) target = $region52
          $region51: #{model_forward.1} parent=47 // pred_region
            %v413 = vld [vmem:[%s1] sm:$0xff]
            %v414 = vld [vmem:[%s1 + $0x8] sm:$0xff]
            %v415 = vld [vmem:[%s1 + $0x10] sm:$0xff]
            %v416 = vld [vmem:[%s1 + $0x18] sm:$0xff]
            %v417 = vld [vmem:[%s1 + $0x20] sm:$0xff]
            %v418 = vld [vmem:[%s1 + $0x28] sm:$0xff]
            %v419 = vld [vmem:[%s1 + $0x30] sm:$0xff]
            %v420 = vld [vmem:[%s1 + $0x38] sm:$0xff]
            %v421 = vld [vmem:[#allocation3] sm:$0xff]
            %vm422 = vcmask 64512
            %v424 = vsel %vm422, %v413, 0
            %v427 = vsel %vm422, %v414, 0
            %v430 = vsel %vm422, %v415, 0
            %v433 = vsel %vm422, %v416, 0
            %v436 = vsel %vm422, %v417, 0
            %v439 = vsel %vm422, %v418, 0
            %v442 = vsel %vm422, %v419, 0
            %v445 = vsel %vm422, %v420, 0
            %447 = vmatprep.subr.mxu0 0.0
            %448 = vmatpush1.msra.mxu0 %v421
            %449 = vmatprep.subr.mxu0 0.0
            %450 = vmatpush1.msra.mxu0 0.0
            %451 = vmatprep.subr.mxu0 0.0
            %452 = vmatpush1.msra.mxu0 0.0
            %453 = vmatprep.subr.mxu0 0.0
            %454 = vmatpush1.msra.mxu0 0.0
            %455 = vmatprep.subr.mxu0 0.0
            %456 = vmatpush1.msra.mxu0 0.0
            %457 = vmatprep.subr.mxu0 0.0
            %458 = vmatpush1.msra.mxu0 0.0
            %459 = vmatprep.subr.mxu0 0.0
            %460 = vmatpush1.msra.mxu0 0.0
            %461 = vmatprep.subr.mxu0 0.0
            %462 = vmatpush1.msra.mxu0 0.0
            %463 = vmatprep.subr.mxu0 0.0
            %464 = vmatpush1.msra.mxu0 0.0
            %465 = vmatprep.subr.mxu0 0.0
            %466 = vmatpush1.msra.mxu0 0.0
            %467 = vmatprep.subr.mxu0 0.0
            %468 = vmatpush1.msra.mxu0 0.0
            %469 = vmatprep.subr.mxu0 0.0
            %470 = vmatpush1.msra.mxu0 0.0
            %471 = vmatprep.subr.mxu0 0.0
            %472 = vmatpush1.msra.mxu0 0.0
            %473 = vmatprep.subr.mxu0 0.0
            %474 = vmatpush1.msra.mxu0 0.0
            %475 = vmatprep.subr.mxu0 0.0
            %476 = vmatpush1.msra.mxu0 0.0
            %477 = vmatprep.subr.mxu0 0.0
            %478 = vmatpush1.msra.mxu0 0.0
            %479 = vmatprep.subr.mxu0 0.0
            %480 = vmatpush1.msra.mxu0 0.0
            %481 = vmatprep.subr.mxu0 0.0
            %482 = vmatpush1.msra.mxu0 0.0
            %483 = vmatprep.subr.mxu0 0.0
            %484 = vmatpush1.msra.mxu0 0.0
            %485 = vmatprep.subr.mxu0 0.0
            %486 = vmatpush1.msra.mxu0 0.0
            %487 = vmatprep.subr.mxu0 0.0
            %488 = vmatpush1.msra.mxu0 0.0
            %489 = vmatprep.subr.mxu0 0.0
            %490 = vmatpush1.msra.mxu0 0.0
            %491 = vmatprep.subr.mxu0 0.0
            %492 = vmatpush1.msra.mxu0 0.0
            %493 = vmatprep.subr.mxu0 0.0
            %494 = vmatpush1.msra.mxu0 0.0
            %495 = vmatprep.subr.mxu0 0.0
            %496 = vmatpush1.msra.mxu0 0.0
            %497 = vmatprep.subr.mxu0 0.0
            %498 = vmatpush1.msra.mxu0 0.0
            %499 = vmatprep.subr.mxu0 0.0
            %500 = vmatpush1.msra.mxu0 0.0
            %501 = vmatprep.subr.mxu0 0.0
            %502 = vmatpush1.msra.mxu0 0.0
            %503 = vmatprep.subr.mxu0 0.0
            %504 = vmatpush1.msra.mxu0 0.0
            %505 = vmatprep.subr.mxu0 0.0
            %506 = vmatpush1.msra.mxu0 0.0
            %507 = vmatprep.subr.mxu0 0.0
            %508 = vmatpush1.msra.mxu0 0.0
            %509 = vmatprep.subr.mxu0 0.0
            %510 = vmatpush1.msra.mxu0 0.0
            %511 = vmatprep.mubr.f32.mxu0 0.0
            %512 = vmatmul.mubr.f32.gmra.mrb[0].mxu0 %v424
            %v513 = vpop.f32.mrb[0].mxu0
            %v514 = vadd.f32 0.0, %v513
            %v515 = vpop.f32.mrb[0].mxu0
            %516 = vmatprep.mubr.f32.mxu0 0.0
            %517 = vmatmul.mubr.f32.gmra.mrb[0].mxu0 %v427
            %v518 = vpop.f32.mrb[0].mxu0
            %v519 = vadd.f32 0.0, %v518
            %v520 = vpop.f32.mrb[0].mxu0
            %521 = vmatprep.mubr.f32.mxu0 0.0
            %522 = vmatmul.mubr.f32.gmra.mrb[0].mxu0 %v430
            %v523 = vpop.f32.mrb[0].mxu0
            %v524 = vadd.f32 0.0, %v523
            %v525 = vpop.f32.mrb[0].mxu0
            %526 = vmatprep.mubr.f32.mxu0 0.0
            %527 = vmatmul.mubr.f32.gmra.mrb[0].mxu0 %v433
            %v528 = vpop.f32.mrb[0].mxu0
            %v529 = vadd.f32 0.0, %v528
            %v530 = vpop.f32.mrb[0].mxu0
            %531 = vmatprep.mubr.f32.mxu0 0.0
            %532 = vmatmul.mubr.f32.gmra.mrb[0].mxu0 %v436
            %v533 = vpop.f32.mrb[0].mxu0
            %v534 = vadd.f32 0.0, %v533
            %v535 = vpop.f32.mrb[0].mxu0
            %536 = vmatprep.mubr.f32.mxu0 0.0
            %537 = vmatmul.mubr.f32.gmra.mrb[0].mxu0 %v439
            %v538 = vpop.f32.mrb[0].mxu0
            %v539 = vadd.f32 0.0, %v538
            %v540 = vpop.f32.mrb[0].mxu0
            %541 = vmatprep.mubr.f32.mxu0 0.0
            %542 = vmatmul.mubr.f32.gmra.mrb[0].mxu0 %v442
            %v543 = vpop.f32.mrb[0].mxu0
            %v544 = vadd.f32 0.0, %v543
            %v545 = vpop.f32.mrb[0].mxu0
            %546 = vmatprep.mubr.f32.mxu0 0.0
            %547 = vmatmul.mubr.f32.gmra.mrb[0].mxu0 %v445
            %v548 = vpop.f32.mrb[0].mxu0
            %v549 = vadd.f32 0.0, %v548
            %v550 = vpop.f32.mrb[0].mxu0
            %551 = vdwg.mxu0
            %v552 = vld [vmem:[#allocation2] sm:$0xff]
            %553 = vmatprep.subr.mxu0 0.0
            %554 = vmatpush1.msra.mxu0 %v552
            %555 = vmatprep.subr.mxu0 0.0
            %556 = vmatpush1.msra.mxu0 0.0
            %557 = vmatprep.subr.mxu0 0.0
            %558 = vmatpush1.msra.mxu0 0.0
            %559 = vmatprep.subr.mxu0 0.0
            %560 = vmatpush1.msra.mxu0 0.0
            %561 = vmatprep.subr.mxu0 0.0
            %562 = vmatpush1.msra.mxu0 0.0
            %563 = vmatprep.subr.mxu0 0.0
            %564 = vmatpush1.msra.mxu0 0.0
            %565 = vmatprep.subr.mxu0 0.0
            %566 = vmatpush1.msra.mxu0 0.0
            %567 = vmatprep.subr.mxu0 0.0
            %568 = vmatpush1.msra.mxu0 0.0
            %569 = vmatprep.subr.mxu0 0.0
            %570 = vmatpush1.msra.mxu0 0.0
            %571 = vmatprep.subr.mxu0 0.0
            %572 = vmatpush1.msra.mxu0 0.0
            %573 = vmatprep.subr.mxu0 0.0
            %574 = vmatpush1.msra.mxu0 0.0
            %575 = vmatprep.subr.mxu0 0.0
            %576 = vmatpush1.msra.mxu0 0.0
            %577 = vmatprep.subr.mxu0 0.0
            %578 = vmatpush1.msra.mxu0 0.0
            %579 = vmatprep.subr.mxu0 0.0
            %580 = vmatpush1.msra.mxu0 0.0
            %581 = vmatprep.subr.mxu0 0.0
            %582 = vmatpush1.msra.mxu0 0.0
            %583 = vmatprep.subr.mxu0 0.0
            %584 = vmatpush1.msra.mxu0 0.0
            %585 = vmatprep.subr.mxu0 0.0
            %586 = vmatpush1.msra.mxu0 0.0
            %587 = vmatprep.subr.mxu0 0.0
            %588 = vmatpush1.msra.mxu0 0.0
            %589 = vmatprep.subr.mxu0 0.0
            %590 = vmatpush1.msra.mxu0 0.0
            %591 = vmatprep.subr.mxu0 0.0
            %592 = vmatpush1.msra.mxu0 0.0
            %593 = vmatprep.subr.mxu0 0.0
            %594 = vmatpush1.msra.mxu0 0.0
            %595 = vmatprep.subr.mxu0 0.0
            %596 = vmatpush1.msra.mxu0 0.0
            %597 = vmatprep.subr.mxu0 0.0
            %598 = vmatpush1.msra.mxu0 0.0
            %599 = vmatprep.subr.mxu0 0.0
            %600 = vmatpush1.msra.mxu0 0.0
            %601 = vmatprep.subr.mxu0 0.0
            %602 = vmatpush1.msra.mxu0 0.0
            %603 = vmatprep.subr.mxu0 0.0
            %604 = vmatpush1.msra.mxu0 0.0
            %605 = vmatprep.subr.mxu0 0.0
            %606 = vmatpush1.msra.mxu0 0.0
            %607 = vmatprep.subr.mxu0 0.0
            %608 = vmatpush1.msra.mxu0 0.0
            %609 = vmatprep.subr.mxu0 0.0
            %610 = vmatpush1.msra.mxu0 0.0
            %611 = vmatprep.subr.mxu0 0.0
            %612 = vmatpush1.msra.mxu0 0.0
            %613 = vmatprep.subr.mxu0 0.0
            %614 = vmatpush1.msra.mxu0 0.0
            %615 = vmatprep.subr.mxu0 0.0
            %616 = vmatpush1.msra.mxu0 0.0
            %617 = vmatprep.mubr.f32.mxu0 0.0
            %618 = vmatmul.mubr.f32.gmra.mrb[0].mxu0 %v424
            %v619 = vpop.f32.mrb[0].mxu0
            %v620 = vadd.f32 0.0, %v619
            %v621 = vpop.f32.mrb[0].mxu0
            %622 = vmatprep.mubr.f32.mxu0 0.0
            %623 = vmatmul.mubr.f32.gmra.mrb[0].mxu0 %v427
            %v624 = vpop.f32.mrb[0].mxu0
            %v625 = vadd.f32 0.0, %v624
            %v626 = vpop.f32.mrb[0].mxu0
            %627 = vmatprep.mubr.f32.mxu0 0.0
            %628 = vmatmul.mubr.f32.gmra.mrb[0].mxu0 %v430
            %v629 = vpop.f32.mrb[0].mxu0
            %v630 = vadd.f32 0.0, %v629
            %v631 = vpop.f32.mrb[0].mxu0
            %632 = vmatprep.mubr.f32.mxu0 0.0
            %633 = vmatmul.mubr.f32.gmra.mrb[0].mxu0 %v433
            %v634 = vpop.f32.mrb[0].mxu0
            %v635 = vadd.f32 0.0, %v634
            %v636 = vpop.f32.mrb[0].mxu0
            %637 = vmatprep.mubr.f32.mxu0 0.0
            %638 = vmatmul.mubr.f32.gmra.mrb[0].mxu0 %v436
            %v639 = vpop.f32.mrb[0].mxu0
            %v640 = vadd.f32 0.0, %v639
            %v641 = vpop.f32.mrb[0].mxu0
            %642 = vmatprep.mubr.f32.mxu0 0.0
            %643 = vmatmul.mubr.f32.gmra.mrb[0].mxu0 %v439
            %v644 = vpop.f32.mrb[0].mxu0
            %v645 = vadd.f32 0.0, %v644
            %v646 = vpop.f32.mrb[0].mxu0
            %647 = vmatprep.mubr.f32.mxu0 0.0
            %648 = vmatmul.mubr.f32.gmra.mrb[0].mxu0 %v442
            %v649 = vpop.f32.mrb[0].mxu0
            %v650 = vadd.f32 0.0, %v649
            %v651 = vpop.f32.mrb[0].mxu0
            %652 = vmatprep.mubr.f32.mxu0 0.0
            %653 = vmatmul.mubr.f32.gmra.mrb[0].mxu0 %v445
            %v654 = vpop.f32.mrb[0].mxu0
            %v655 = vadd.f32 0.0, %v654
            %v656 = vpop.f32.mrb[0].mxu0
            %657 = vdwg.mxu0
            %v658 = vmul.f32 %v620, %v413
            %v659 = vmul.f32 %v625, %v414
            %v660 = vmul.f32 %v630, %v415
            %v661 = vmul.f32 %v635, %v416
            %v662 = vmul.f32 %v640, %v417
            %v663 = vmul.f32 %v645, %v418
            %v664 = vmul.f32 %v650, %v419
            %v665 = vmul.f32 %v655, %v420
            %v666 = vsel %vm422, %v658, 0.0
            %667 = vadd.xlane.f32.xlu0 %v666
            %v668 = vpop.xlane.xlu0 %667
            %v669 = vsel %vm422, %v659, 0.0
            %670 = vadd.xlane.f32.xlu0 %v669
            %v671 = vpop.xlane.xlu0 %670
            %v672 = vsel %vm422, %v660, 0.0
            %673 = vadd.xlane.f32.xlu0 %v672
            %v674 = vpop.xlane.xlu0 %673
            %v675 = vsel %vm422, %v661, 0.0
            %676 = vadd.xlane.f32.xlu0 %v675
            %v677 = vpop.xlane.xlu0 %676
            %v678 = vsel %vm422, %v662, 0.0
            %679 = vadd.xlane.f32.xlu0 %v678
            %v680 = vpop.xlane.xlu0 %679
            %v681 = vsel %vm422, %v663, 0.0
            %682 = vadd.xlane.f32.xlu0 %v681
            %v683 = vpop.xlane.xlu0 %682
            %v684 = vsel %vm422, %v664, 0.0
            %685 = vadd.xlane.f32.xlu0 %v684
            %v686 = vpop.xlane.xlu0 %685
            %v687 = vsel %vm422, %v665, 0.0
            %688 = vadd.xlane.f32.xlu0 %v687
            %v689 = vpop.xlane.xlu0 %688
            %v690 = vmul.f32 %v514, 0.00048828125
            %v691 = vmul.f32 %v519, 0.00048828125
            %v692 = vmul.f32 %v524, 0.00048828125
            %v693 = vmul.f32 %v529, 0.00048828125
            %v694 = vmul.f32 %v534, 0.00048828125
            %v695 = vmul.f32 %v539, 0.00048828125
            %v696 = vmul.f32 %v544, 0.00048828125
            %v697 = vmul.f32 %v549, 0.00048828125
            %v698 = vmul.f32 %v668, 0.00048828125
            %v699 = vmul.f32 %v671, 0.00048828125
            %v700 = vmul.f32 %v674, 0.00048828125
            %v701 = vmul.f32 %v677, 0.00048828125
            %v702 = vmul.f32 %v680, 0.00048828125
            %v703 = vmul.f32 %v683, 0.00048828125
            %v704 = vmul.f32 %v686, 0.00048828125
            %v705 = vmul.f32 %v689, 0.00048828125
            %v706 = vmul.f32 %v690, %v690
            %v707 = vmul.f32 %v691, %v691
            %v708 = vmul.f32 %v692, %v692
            %v709 = vmul.f32 %v693, %v693
            %v710 = vmul.f32 %v694, %v694
            %v711 = vmul.f32 %v695, %v695
            %v712 = vmul.f32 %v696, %v696
            %v713 = vmul.f32 %v697, %v697
            %v714 = vsub.f32 %v698, %v706
            %v715 = vsub.f32 %v699, %v707
            %v716 = vsub.f32 %v700, %v708
            %v717 = vsub.f32 %v701, %v709
            %v718 = vsub.f32 %v702, %v710
            %v719 = vsub.f32 %v703, %v711
            %v720 = vsub.f32 %v704, %v712
            %v721 = vsub.f32 %v705, %v713
            %v722 = vld [vmem:[%s2] sm:$0xff]
            %v723 = vld [vmem:[%s2 + $0x8] sm:$0xff]
            %v724 = vld [vmem:[%s2 + $0x10] sm:$0xff]
            %v725 = vld [vmem:[%s2 + $0x18] sm:$0xff]
            %v726 = vld [vmem:[%s2 + $0x20] sm:$0xff]
            %v727 = vld [vmem:[%s2 + $0x28] sm:$0xff]
            %v728 = vld [vmem:[%s2 + $0x30] sm:$0xff]
            %v729 = vld [vmem:[%s2 + $0x38] sm:$0xff]
            %v730 = vadd.f32 %v714, 1e-05
            %v731 = vadd.f32 %v715, 1e-05
            %v732 = vadd.f32 %v716, 1e-05
            %v733 = vadd.f32 %v717, 1e-05
            %v734 = vadd.f32 %v718, 1e-05
            %v735 = vadd.f32 %v719, 1e-05
            %v736 = vadd.f32 %v720, 1e-05
            %v737 = vadd.f32 %v721, 1e-05
            %v738 = vrsqrt.pop %v730
            %v739 = vrsqrt.pop %v731
            %v740 = vrsqrt.pop %v732
            %v741 = vrsqrt.pop %v733
            %v742 = vrsqrt.pop %v734
            %v743 = vrsqrt.pop %v735
            %v744 = vrsqrt.pop %v736
            %v745 = vrsqrt.pop %v737
            %v746 = vmul.f32 %v722, %v738
            %v747 = vmul.f32 %v723, %v739
            %v748 = vmul.f32 %v724, %v740
            %v749 = vmul.f32 %v725, %v741
            %v750 = vmul.f32 %v726, %v742
            %v751 = vmul.f32 %v727, %v743
            %v752 = vmul.f32 %v728, %v744
            %v753 = vmul.f32 %v729, %v745
            %vm754 = vcmask 7168
            %755 = vst.msk [vmem:[#allocation4] sm:$0xff] %vm754, %v746
            %756 = vst.msk [vmem:[#allocation4 + $0x8] sm:$0xff] %vm754, %v747
            %757 = vst.msk [vmem:[#allocation4 + $0x10] sm:$0xff] %vm754, %v748
            %758 = vst.msk [vmem:[#allocation4 + $0x18] sm:$0xff] %vm754, %v749
            %759 = vst.msk [vmem:[#allocation4 + $0x20] sm:$0xff] %vm754, %v750
            %760 = vst.msk [vmem:[#allocation4 + $0x28] sm:$0xff] %vm754, %v751
            %761 = vst.msk [vmem:[#allocation4 + $0x30] sm:$0xff] %vm754, %v752
            %762 = vst.msk [vmem:[#allocation4 + $0x38] sm:$0xff] %vm754, %v753
            %v763 = vld [vmem:[%s3] sm:$0xff]
            %v764 = vld [vmem:[%s3 + $0x8] sm:$0xff]
            %v765 = vld [vmem:[%s3 + $0x10] sm:$0xff]
            %v766 = vld [vmem:[%s3 + $0x18] sm:$0xff]
            %v767 = vld [vmem:[%s3 + $0x20] sm:$0xff]
            %v768 = vld [vmem:[%s3 + $0x28] sm:$0xff]
            %v769 = vld [vmem:[%s3 + $0x30] sm:$0xff]
            %v770 = vld [vmem:[%s3 + $0x38] sm:$0xff]
            %v771 = vmul.f32 %v690, %v746
            %v772 = vmul.f32 %v691, %v747
            %v773 = vmul.f32 %v692, %v748
            %v774 = vmul.f32 %v693, %v749
            %v775 = vmul.f32 %v694, %v750
            %v776 = vmul.f32 %v695, %v751
            %v777 = vmul.f32 %v696, %v752
            %v778 = vmul.f32 %v697, %v753
            %v779 = vsub.f32 %v763, %v771
            %v780 = vsub.f32 %v764, %v772
            %v781 = vsub.f32 %v765, %v773
            %v782 = vsub.f32 %v766, %v774
            %v783 = vsub.f32 %v767, %v775
            %v784 = vsub.f32 %v768, %v776
            %v785 = vsub.f32 %v769, %v777
            %v786 = vsub.f32 %v770, %v778
            %787 = vst.msk [vmem:[#allocation5] sm:$0xff] %vm754, %v779
            %788 = vst.msk [vmem:[#allocation5 + $0x8] sm:$0xff] %vm754, %v780
            %789 = vst.msk [vmem:[#allocation5 + $0x10] sm:$0xff] %vm754, %v781
            %790 = vst.msk [vmem:[#allocation5 + $0x18] sm:$0xff] %vm754, %v782
            %791 = vst.msk [vmem:[#allocation5 + $0x20] sm:$0xff] %vm754, %v783
            %792 = vst.msk [vmem:[#allocation5 + $0x28] sm:$0xff] %vm754, %v784
            %793 = vst.msk [vmem:[#allocation5 + $0x30] sm:$0xff] %vm754, %v785
            %794 = vst.msk [vmem:[#allocation5 + $0x38] sm:$0xff] %vm754, %v786
          $region52: #{model_forward.1} parent=47 // pred_fallthru
            _
          %v795 = vld [vmem:[%s1] sm:$0xff]
          %v796 = vld [vmem:[%s1 + $0x8] sm:$0xff]
          %v797 = vld [vmem:[%s1 + $0x10] sm:$0xff]
          %v798 = vld [vmem:[%s1 + $0x18] sm:$0xff]
          %v799 = vld [vmem:[%s1 + $0x20] sm:$0xff]
          %v800 = vld [vmem:[%s1 + $0x28] sm:$0xff]
          %v801 = vld [vmem:[%s1 + $0x30] sm:$0xff]
          %v802 = vld [vmem:[%s1 + $0x38] sm:$0xff]
          %v803 = vld [vmem:[%s231] sm:$0xff]
          %v804 = vld [vmem:[%s231 + $0x8] sm:$0xff]
          %v805 = vld [vmem:[%s231 + $0x10] sm:$0xff]
          %v806 = vld [vmem:[%s231 + $0x18] sm:$0xff]
          %vm807 = vcmask 64512
          %v809 = vsel %vm807, %v795, 0
          %v812 = vsel %vm807, %v796, 0
          %v815 = vsel %vm807, %v797, 0
          %v818 = vsel %vm807, %v798, 0
          %v821 = vsel %vm807, %v799, 0
          %v824 = vsel %vm807, %v800, 0
          %v827 = vsel %vm807, %v801, 0
          %v830 = vsel %vm807, %v802, 0
          %832 = vmatprep.subr.mxu0 %v804
          %833 = vmatpush1.msra.mxu0 %v803
          %834 = vmatprep.subr.mxu0 0.0
          %835 = vmatpush1.msra.mxu0 0.0
          %836 = vmatprep.subr.mxu0 0.0
          %837 = vmatpush1.msra.mxu0 0.0
          %838 = vmatprep.subr.mxu0 0.0
          %839 = vmatpush1.msra.mxu0 0.0
          %840 = vmatprep.subr.mxu0 0.0
          %841 = vmatpush1.msra.mxu0 0.0
          %842 = vmatprep.subr.mxu0 0.0
          %843 = vmatpush1.msra.mxu0 0.0
          %844 = vmatprep.subr.mxu0 0.0
          %845 = vmatpush1.msra.mxu0 0.0
          %846 = vmatprep.subr.mxu0 0.0
          %847 = vmatpush1.msra.mxu0 0.0
          %848 = vmatprep.subr.mxu0 0.0
          %849 = vmatpush1.msra.mxu0 0.0
          %850 = vmatprep.subr.mxu0 0.0
          %851 = vmatpush1.msra.mxu0 0.0
          %852 = vmatprep.subr.mxu0 0.0
          %853 = vmatpush1.msra.mxu0 0.0
          %854 = vmatprep.subr.mxu0 0.0
          %855 = vmatpush1.msra.mxu0 0.0
          %856 = vmatprep.subr.mxu0 0.0
          %857 = vmatpush1.msra.mxu0 0.0
          %858 = vmatprep.subr.mxu0 0.0
          %859 = vmatpush1.msra.mxu0 0.0
          %860 = vmatprep.subr.mxu0 0.0
          %861 = vmatpush1.msra.mxu0 0.0
          %862 = vmatprep.subr.mxu0 0.0
          %863 = vmatpush1.msra.mxu0 0.0
          %864 = vmatprep.subr.mxu0 0.0
          %865 = vmatpush1.msra.mxu0 0.0
          %866 = vmatprep.subr.mxu0 0.0
          %867 = vmatpush1.msra.mxu0 0.0
          %868 = vmatprep.subr.mxu0 0.0
          %869 = vmatpush1.msra.mxu0 0.0
          %870 = vmatprep.subr.mxu0 0.0
          %871 = vmatpush1.msra.mxu0 0.0
          %872 = vmatprep.subr.mxu0 0.0
          %873 = vmatpush1.msra.mxu0 0.0
          %874 = vmatprep.subr.mxu0 0.0
          %875 = vmatpush1.msra.mxu0 0.0
          %876 = vmatprep.subr.mxu0 0.0
          %877 = vmatpush1.msra.mxu0 0.0
          %878 = vmatprep.subr.mxu0 0.0
          %879 = vmatpush1.msra.mxu0 0.0
          %880 = vmatprep.subr.mxu0 0.0
          %881 = vmatpush1.msra.mxu0 0.0
          %882 = vmatprep.subr.mxu0 0.0
          %883 = vmatpush1.msra.mxu0 0.0
          %884 = vmatprep.subr.mxu0 0.0
          %885 = vmatpush1.msra.mxu0 0.0
          %886 = vmatprep.subr.mxu0 0.0
          %887 = vmatpush1.msra.mxu0 0.0
          %888 = vmatprep.subr.mxu0 0.0
          %889 = vmatpush1.msra.mxu0 0.0
          %890 = vmatprep.subr.mxu0 0.0
          %891 = vmatpush1.msra.mxu0 0.0
          %892 = vmatprep.subr.mxu0 0.0
          %893 = vmatpush1.msra.mxu0 0.0
          %894 = vmatprep.subr.mxu0 0.0
          %895 = vmatpush1.msra.mxu0 0.0
          %896 = vmatprep.mubr.f32.mxu0 0.0
          %897 = vmatmul.mubr.f32.gmra.mrb[0].mxu0 %v809
          %v898 = vpop.f32.mrb[0].mxu0
          %v899 = vadd.f32 0.0, %v898
          %v900 = vpop.f32.mrb[0].mxu0
          %v901 = vadd.f32 0.0, %v900
          %902 = vmatprep.mubr.f32.mxu0 0.0
          %903 = vmatmul.mubr.f32.gmra.mrb[0].mxu0 %v812
          %v904 = vpop.f32.mrb[0].mxu0
          %v905 = vadd.f32 0.0, %v904
          %v906 = vpop.f32.mrb[0].mxu0
          %v907 = vadd.f32 0.0, %v906
          %908 = vmatprep.mubr.f32.mxu0 0.0
          %909 = vmatmul.mubr.f32.gmra.mrb[0].mxu0 %v815
          %v910 = vpop.f32.mrb[0].mxu0
          %v911 = vadd.f32 0.0, %v910
          %v912 = vpop.f32.mrb[0].mxu0
          %v913 = vadd.f32 0.0, %v912
          %914 = vmatprep.mubr.f32.mxu0 0.0
          %915 = vmatmul.mubr.f32.gmra.mrb[0].mxu0 %v818
          %v916 = vpop.f32.mrb[0].mxu0
          %v917 = vadd.f32 0.0, %v916
          %v918 = vpop.f32.mrb[0].mxu0
          %v919 = vadd.f32 0.0, %v918
          %920 = vmatprep.mubr.f32.mxu0 0.0
          %921 = vmatmul.mubr.f32.gmra.mrb[0].mxu0 %v821
          %v922 = vpop.f32.mrb[0].mxu0
          %v923 = vadd.f32 0.0, %v922
          %v924 = vpop.f32.mrb[0].mxu0
          %v925 = vadd.f32 0.0, %v924
          %926 = vmatprep.mubr.f32.mxu0 0.0
          %927 = vmatmul.mubr.f32.gmra.mrb[0].mxu0 %v824
          %v928 = vpop.f32.mrb[0].mxu0
          %v929 = vadd.f32 0.0, %v928
          %v930 = vpop.f32.mrb[0].mxu0
          %v931 = vadd.f32 0.0, %v930
          %932 = vmatprep.mubr.f32.mxu0 0.0
          %933 = vmatmul.mubr.f32.gmra.mrb[0].mxu0 %v827
          %v934 = vpop.f32.mrb[0].mxu0
          %v935 = vadd.f32 0.0, %v934
          %v936 = vpop.f32.mrb[0].mxu0
          %v937 = vadd.f32 0.0, %v936
          %938 = vmatprep.mubr.f32.mxu0 0.0
          %939 = vmatmul.mubr.f32.gmra.mrb[0].mxu0 %v830
          %v940 = vpop.f32.mrb[0].mxu0
          %v941 = vadd.f32 0.0, %v940
          %v942 = vpop.f32.mrb[0].mxu0
          %v943 = vadd.f32 0.0, %v942
          %944 = vdwg.mxu0
          %945 = vmatprep.subr.mxu0 %v806
          %946 = vmatpush1.msra.mxu0 %v805
          %947 = vmatprep.subr.mxu0 0.0
          %948 = vmatpush1.msra.mxu0 0.0
          %949 = vmatprep.subr.mxu0 0.0
          %950 = vmatpush1.msra.mxu0 0.0
          %951 = vmatprep.subr.mxu0 0.0
          %952 = vmatpush1.msra.mxu0 0.0
          %953 = vmatprep.subr.mxu0 0.0
          %954 = vmatpush1.msra.mxu0 0.0
          %955 = vmatprep.subr.mxu0 0.0
          %956 = vmatpush1.msra.mxu0 0.0
          %957 = vmatprep.subr.mxu0 0.0
          %958 = vmatpush1.msra.mxu0 0.0
          %959 = vmatprep.subr.mxu0 0.0
          %960 = vmatpush1.msra.mxu0 0.0
          %961 = vmatprep.subr.mxu0 0.0
          %962 = vmatpush1.msra.mxu0 0.0
          %963 = vmatprep.subr.mxu0 0.0
          %964 = vmatpush1.msra.mxu0 0.0
          %965 = vmatprep.subr.mxu0 0.0
          %966 = vmatpush1.msra.mxu0 0.0
          %967 = vmatprep.subr.mxu0 0.0
          %968 = vmatpush1.msra.mxu0 0.0
          %969 = vmatprep.subr.mxu0 0.0
          %970 = vmatpush1.msra.mxu0 0.0
          %971 = vmatprep.subr.mxu0 0.0
          %972 = vmatpush1.msra.mxu0 0.0
          %973 = vmatprep.subr.mxu0 0.0
          %974 = vmatpush1.msra.mxu0 0.0
          %975 = vmatprep.subr.mxu0 0.0
          %976 = vmatpush1.msra.mxu0 0.0
          %977 = vmatprep.subr.mxu0 0.0
          %978 = vmatpush1.msra.mxu0 0.0
          %979 = vmatprep.subr.mxu0 0.0
          %980 = vmatpush1.msra.mxu0 0.0
          %981 = vmatprep.subr.mxu0 0.0
          %982 = vmatpush1.msra.mxu0 0.0
          %983 = vmatprep.subr.mxu0 0.0
          %984 = vmatpush1.msra.mxu0 0.0
          %985 = vmatprep.subr.mxu0 0.0
          %986 = vmatpush1.msra.mxu0 0.0
          %987 = vmatprep.subr.mxu0 0.0
          %988 = vmatpush1.msra.mxu0 0.0
          %989 = vmatprep.subr.mxu0 0.0
          %990 = vmatpush1.msra.mxu0 0.0
          %991 = vmatprep.subr.mxu0 0.0
          %992 = vmatpush1.msra.mxu0 0.0
          %993 = vmatprep.subr.mxu0 0.0
          %994 = vmatpush1.msra.mxu0 0.0
          %995 = vmatprep.subr.mxu0 0.0
          %996 = vmatpush1.msra.mxu0 0.0
          %997 = vmatprep.subr.mxu0 0.0
          %998 = vmatpush1.msra.mxu0 0.0
          %999 = vmatprep.subr.mxu0 0.0
          %1000 = vmatpush1.msra.mxu0 0.0
          %1001 = vmatprep.subr.mxu0 0.0
          %1002 = vmatpush1.msra.mxu0 0.0
          %1003 = vmatprep.subr.mxu0 0.0
          %1004 = vmatpush1.msra.mxu0 0.0
          %1005 = vmatprep.subr.mxu0 0.0
          %1006 = vmatpush1.msra.mxu0 0.0
          %1007 = vmatprep.subr.mxu0 0.0
          %1008 = vmatpush1.msra.mxu0 0.0
          %1009 = vmatprep.mubr.f32.mxu0 0.0
          %1010 = vmatmul.mubr.f32.gmra.mrb[0].mxu0 %v809
          %v1011 = vpop.f32.mrb[0].mxu0
          %v1012 = vadd.f32 0.0, %v1011
          %v1013 = vpop.f32.mrb[0].mxu0
          %v1014 = vadd.f32 0.0, %v1013
          %1015 = vmatprep.mubr.f32.mxu0 0.0
          %1016 = vmatmul.mubr.f32.gmra.mrb[0].mxu0 %v812
          %v1017 = vpop.f32.mrb[0].mxu0
          %v1018 = vadd.f32 0.0, %v1017
          %v1019 = vpop.f32.mrb[0].mxu0
          %v1020 = vadd.f32 0.0, %v1019
          %1021 = vmatprep.mubr.f32.mxu0 0.0
          %1022 = vmatmul.mubr.f32.gmra.mrb[0].mxu0 %v815
          %v1023 = vpop.f32.mrb[0].mxu0
          %v1024 = vadd.f32 0.0, %v1023
          %v1025 = vpop.f32.mrb[0].mxu0
          %v1026 = vadd.f32 0.0, %v1025
          %1027 = vmatprep.mubr.f32.mxu0 0.0
          %1028 = vmatmul.mubr.f32.gmra.mrb[0].mxu0 %v818
          %v1029 = vpop.f32.mrb[0].mxu0
          %v1030 = vadd.f32 0.0, %v1029
          %v1031 = vpop.f32.mrb[0].mxu0
          %v1032 = vadd.f32 0.0, %v1031
          %1033 = vmatprep.mubr.f32.mxu0 0.0
          %1034 = vmatmul.mubr.f32.gmra.mrb[0].mxu0 %v821
          %v1035 = vpop.f32.mrb[0].mxu0
          %v1036 = vadd.f32 0.0, %v1035
          %v1037 = vpop.f32.mrb[0].mxu0
          %v1038 = vadd.f32 0.0, %v1037
          %1039 = vmatprep.mubr.f32.mxu0 0.0
          %1040 = vmatmul.mubr.f32.gmra.mrb[0].mxu0 %v824
          %v1041 = vpop.f32.mrb[0].mxu0
          %v1042 = vadd.f32 0.0, %v1041
          %v1043 = vpop.f32.mrb[0].mxu0
          %v1044 = vadd.f32 0.0, %v1043
          %1045 = vmatprep.mubr.f32.mxu0 0.0
          %1046 = vmatmul.mubr.f32.gmra.mrb[0].mxu0 %v827
          %v1047 = vpop.f32.mrb[0].mxu0
          %v1048 = vadd.f32 0.0, %v1047
          %v1049 = vpop.f32.mrb[0].mxu0
          %v1050 = vadd.f32 0.0, %v1049
          %1051 = vmatprep.mubr.f32.mxu0 0.0
          %1052 = vmatmul.mubr.f32.gmra.mrb[0].mxu0 %v830
          %v1053 = vpop.f32.mrb[0].mxu0
          %v1054 = vadd.f32 0.0, %v1053
          %v1055 = vpop.f32.mrb[0].mxu0
          %v1056 = vadd.f32 0.0, %v1055
          %1057 = vdwg.mxu0
          %v1058 = vld [vmem:[#allocation4] sm:$0xff]
          %v1059 = vld [vmem:[#allocation4 + $0x8] sm:$0xff]
          %v1060 = vld [vmem:[#allocation4 + $0x10] sm:$0xff]
          %v1061 = vld [vmem:[#allocation4 + $0x18] sm:$0xff]
          %v1062 = vld [vmem:[#allocation4 + $0x20] sm:$0xff]
          %v1063 = vld [vmem:[#allocation4 + $0x28] sm:$0xff]
          %v1064 = vld [vmem:[#allocation4 + $0x30] sm:$0xff]
          %v1065 = vld [vmem:[#allocation4 + $0x38] sm:$0xff]
          %1067 = vset.pattern.permute.xlu0 0
          %1068 = vperm.xlu0 %1067, %v1058
          %v1069 = vpop.permute.xlu0 %1068
          %1072 = vset.pattern.permute.xlu0 0
          %1073 = vperm.xlu0 %1072, %v1059
          %v1074 = vpop.permute.xlu0 %1073
          %1077 = vset.pattern.permute.xlu0 0
          %1078 = vperm.xlu0 %1077, %v1060
          %v1079 = vpop.permute.xlu0 %1078
          %1082 = vset.pattern.permute.xlu0 0
          %1083 = vperm.xlu0 %1082, %v1061
          %v1084 = vpop.permute.xlu0 %1083
          %1087 = vset.pattern.permute.xlu0 0
          %1088 = vperm.xlu0 %1087, %v1062
          %v1089 = vpop.permute.xlu0 %1088
          %1092 = vset.pattern.permute.xlu0 0
          %1093 = vperm.xlu0 %1092, %v1063
          %v1094 = vpop.permute.xlu0 %1093
          %1097 = vset.pattern.permute.xlu0 0
          %1098 = vperm.xlu0 %1097, %v1064
          %v1099 = vpop.permute.xlu0 %1098
          %1102 = vset.pattern.permute.xlu0 0
          %1103 = vperm.xlu0 %1102, %v1065
          %v1104 = vpop.permute.xlu0 %1103
          %v1106 = vmul.f32 %v899, %v1069
          %v1107 = vmul.f32 %v901, %v1069
          %v1108 = vmul.f32 %v1012, %v1069
          %v1109 = vmul.f32 %v1014, %v1069
          %v1110 = vmul.f32 %v905, %v1074
          %v1111 = vmul.f32 %v907, %v1074
          %v1112 = vmul.f32 %v1018, %v1074
          %v1113 = vmul.f32 %v1020, %v1074
          %v1114 = vmul.f32 %v911, %v1079
          %v1115 = vmul.f32 %v913, %v1079
          %v1116 = vmul.f32 %v1024, %v1079
          %v1117 = vmul.f32 %v1026, %v1079
          %v1118 = vmul.f32 %v917, %v1084
          %v1119 = vmul.f32 %v919, %v1084
          %v1120 = vmul.f32 %v1030, %v1084
          %v1121 = vmul.f32 %v1032, %v1084
          %v1122 = vmul.f32 %v923, %v1089
          %v1123 = vmul.f32 %v925, %v1089
          %v1124 = vmul.f32 %v1036, %v1089
          %v1125 = vmul.f32 %v1038, %v1089
          %v1126 = vmul.f32 %v929, %v1094
          %v1127 = vmul.f32 %v931, %v1094
          %v1128 = vmul.f32 %v1042, %v1094
          %v1129 = vmul.f32 %v1044, %v1094
          %v1130 = vmul.f32 %v935, %v1099
          %v1131 = vmul.f32 %v937, %v1099
          %v1132 = vmul.f32 %v1048, %v1099
          %v1133 = vmul.f32 %v1050, %v1099
          %v1134 = vmul.f32 %v941, %v1104
          %v1135 = vmul.f32 %v943, %v1104
          %v1136 = vmul.f32 %v1054, %v1104
          %v1137 = vmul.f32 %v1056, %v1104
          %v1138 = vld [vmem:[#allocation5] sm:$0xff]
          %v1139 = vld [vmem:[#allocation5 + $0x8] sm:$0xff]
          %v1140 = vld [vmem:[#allocation5 + $0x10] sm:$0xff]
          %v1141 = vld [vmem:[#allocation5 + $0x18] sm:$0xff]
          %v1142 = vld [vmem:[#allocation5 + $0x20] sm:$0xff]
          %v1143 = vld [vmem:[#allocation5 + $0x28] sm:$0xff]
          %v1144 = vld [vmem:[#allocation5 + $0x30] sm:$0xff]
          %v1145 = vld [vmem:[#allocation5 + $0x38] sm:$0xff]
          %1147 = vset.pattern.permute.xlu0 0
          %1148 = vperm.xlu0 %1147, %v1138
          %v1149 = vpop.permute.xlu0 %1148
          %1152 = vset.pattern.permute.xlu0 0
          %1153 = vperm.xlu0 %1152, %v1139
          %v1154 = vpop.permute.xlu0 %1153
          %1157 = vset.pattern.permute.xlu0 0
          %1158 = vperm.xlu0 %1157, %v1140
          %v1159 = vpop.permute.xlu0 %1158
          %1162 = vset.pattern.permute.xlu0 0
          %1163 = vperm.xlu0 %1162, %v1141
          %v1164 = vpop.permute.xlu0 %1163
          %1167 = vset.pattern.permute.xlu0 0
          %1168 = vperm.xlu0 %1167, %v1142
          %v1169 = vpop.permute.xlu0 %1168
          %1172 = vset.pattern.permute.xlu0 0
          %1173 = vperm.xlu0 %1172, %v1143
          %v1174 = vpop.permute.xlu0 %1173
          %1177 = vset.pattern.permute.xlu0 0
          %1178 = vperm.xlu0 %1177, %v1144
          %v1179 = vpop.permute.xlu0 %1178
          %1182 = vset.pattern.permute.xlu0 0
          %1183 = vperm.xlu0 %1182, %v1145
          %v1184 = vpop.permute.xlu0 %1183
          %v1186 = vadd.f32 %v1106, %v1149
          %v1187 = vadd.f32 %v1107, %v1149
          %v1188 = vadd.f32 %v1108, %v1149
          %v1189 = vadd.f32 %v1109, %v1149
          %v1190 = vadd.f32 %v1110, %v1154
          %v1191 = vadd.f32 %v1111, %v1154
          %v1192 = vadd.f32 %v1112, %v1154
          %v1193 = vadd.f32 %v1113, %v1154
          %v1194 = vadd.f32 %v1114, %v1159
          %v1195 = vadd.f32 %v1115, %v1159
          %v1196 = vadd.f32 %v1116, %v1159
          %v1197 = vadd.f32 %v1117, %v1159
          %v1198 = vadd.f32 %v1118, %v1164
          %v1199 = vadd.f32 %v1119, %v1164
          %v1200 = vadd.f32 %v1120, %v1164
          %v1201 = vadd.f32 %v1121, %v1164
          %v1202 = vadd.f32 %v1122, %v1169
          %v1203 = vadd.f32 %v1123, %v1169
          %v1204 = vadd.f32 %v1124, %v1169
          %v1205 = vadd.f32 %v1125, %v1169
          %v1206 = vadd.f32 %v1126, %v1174
          %v1207 = vadd.f32 %v1127, %v1174
          %v1208 = vadd.f32 %v1128, %v1174
          %v1209 = vadd.f32 %v1129, %v1174
          %v1210 = vadd.f32 %v1130, %v1179
          %v1211 = vadd.f32 %v1131, %v1179
          %v1212 = vadd.f32 %v1132, %v1179
          %v1213 = vadd.f32 %v1133, %v1179
          %v1214 = vadd.f32 %v1134, %v1184
          %v1215 = vadd.f32 %v1135, %v1184
          %v1216 = vadd.f32 %v1136, %v1184
          %v1217 = vadd.f32 %v1137, %v1184
          %v1218 = vmul.f32 %v1186, %v1186
          %v1219 = vmul.f32 %v1187, %v1187
          %v1220 = vmul.f32 %v1188, %v1188
          %v1221 = vmul.f32 %v1189, %v1189
          %v1222 = vmul.f32 %v1190, %v1190
          %v1223 = vmul.f32 %v1191, %v1191
          %v1224 = vmul.f32 %v1192, %v1192
          %v1225 = vmul.f32 %v1193, %v1193
          %v1226 = vmul.f32 %v1194, %v1194
          %v1227 = vmul.f32 %v1195, %v1195
          %v1228 = vmul.f32 %v1196, %v1196
          %v1229 = vmul.f32 %v1197, %v1197
          %v1230 = vmul.f32 %v1198, %v1198
          %v1231 = vmul.f32 %v1199, %v1199
          %v1232 = vmul.f32 %v1200, %v1200
          %v1233 = vmul.f32 %v1201, %v1201
          %v1234 = vmul.f32 %v1202, %v1202
          %v1235 = vmul.f32 %v1203, %v1203
          %v1236 = vmul.f32 %v1204, %v1204
          %v1237 = vmul.f32 %v1205, %v1205
          %v1238 = vmul.f32 %v1206, %v1206
          %v1239 = vmul.f32 %v1207, %v1207
          %v1240 = vmul.f32 %v1208, %v1208
          %v1241 = vmul.f32 %v1209, %v1209
          %v1242 = vmul.f32 %v1210, %v1210
          %v1243 = vmul.f32 %v1211, %v1211
          %v1244 = vmul.f32 %v1212, %v1212
          %v1245 = vmul.f32 %v1213, %v1213
          %v1246 = vmul.f32 %v1214, %v1214
          %v1247 = vmul.f32 %v1215, %v1215
          %v1248 = vmul.f32 %v1216, %v1216
          %v1249 = vmul.f32 %v1217, %v1217
          %v1250 = vmul.f32 %v1218, %v1186
          %v1251 = vmul.f32 %v1219, %v1187
          %v1252 = vmul.f32 %v1220, %v1188
          %v1253 = vmul.f32 %v1221, %v1189
          %v1254 = vmul.f32 %v1222, %v1190
          %v1255 = vmul.f32 %v1223, %v1191
          %v1256 = vmul.f32 %v1224, %v1192
          %v1257 = vmul.f32 %v1225, %v1193
          %v1258 = vmul.f32 %v1226, %v1194
          %v1259 = vmul.f32 %v1227, %v1195
          %v1260 = vmul.f32 %v1228, %v1196
          %v1261 = vmul.f32 %v1229, %v1197
          %v1262 = vmul.f32 %v1230, %v1198
          %v1263 = vmul.f32 %v1231, %v1199
          %v1264 = vmul.f32 %v1232, %v1200
          %v1265 = vmul.f32 %v1233, %v1201
          %v1266 = vmul.f32 %v1234, %v1202
          %v1267 = vmul.f32 %v1235, %v1203
          %v1268 = vmul.f32 %v1236, %v1204
          %v1269 = vmul.f32 %v1237, %v1205
          %v1270 = vmul.f32 %v1238, %v1206
          %v1271 = vmul.f32 %v1239, %v1207
          %v1272 = vmul.f32 %v1240, %v1208
          %v1273 = vmul.f32 %v1241, %v1209
          %v1274 = vmul.f32 %v1242, %v1210
          %v1275 = vmul.f32 %v1243, %v1211
          %v1276 = vmul.f32 %v1244, %v1212
          %v1277 = vmul.f32 %v1245, %v1213
          %v1278 = vmul.f32 %v1246, %v1214
          %v1279 = vmul.f32 %v1247, %v1215
          %v1280 = vmul.f32 %v1248, %v1216
          %v1281 = vmul.f32 %v1249, %v1217
          %v1282 = vmul.f32 %v1250, 0.044715
          %v1283 = vmul.f32 %v1251, 0.044715
          %v1284 = vmul.f32 %v1252, 0.044715
          %v1285 = vmul.f32 %v1253, 0.044715
          %v1286 = vmul.f32 %v1254, 0.044715
          %v1287 = vmul.f32 %v1255, 0.044715
          %v1288 = vmul.f32 %v1256, 0.044715
          %v1289 = vmul.f32 %v1257, 0.044715
          %v1290 = vmul.f32 %v1258, 0.044715
          %v1291 = vmul.f32 %v1259, 0.044715
          %v1292 = vmul.f32 %v1260, 0.044715
          %v1293 = vmul.f32 %v1261, 0.044715
          %v1294 = vmul.f32 %v1262, 0.044715
          %v1295 = vmul.f32 %v1263, 0.044715
          %v1296 = vmul.f32 %v1264, 0.044715
          %v1297 = vmul.f32 %v1265, 0.044715
          %v1298 = vmul.f32 %v1266, 0.044715
          %v1299 = vmul.f32 %v1267, 0.044715
          %v1300 = vmul.f32 %v1268, 0.044715
          %v1301 = vmul.f32 %v1269, 0.044715
          %v1302 = vmul.f32 %v1270, 0.044715
          %v1303 = vmul.f32 %v1271, 0.044715
          %v1304 = vmul.f32 %v1272, 0.044715
          %v1305 = vmul.f32 %v1273, 0.044715
          %v1306 = vmul.f32 %v1274, 0.044715
          %v1307 = vmul.f32 %v1275, 0.044715
          %v1308 = vmul.f32 %v1276, 0.044715
          %v1309 = vmul.f32 %v1277, 0.044715
          %v1310 = vmul.f32 %v1278, 0.044715
          %v1311 = vmul.f32 %v1279, 0.044715
          %v1312 = vmul.f32 %v1280, 0.044715
          %v1313 = vmul.f32 %v1281, 0.044715
          %v1314 = vadd.f32 %v1186, %v1282
          %v1315 = vadd.f32 %v1187, %v1283
          %v1316 = vadd.f32 %v1188, %v1284
          %v1317 = vadd.f32 %v1189, %v1285
          %v1318 = vadd.f32 %v1190, %v1286
          %v1319 = vadd.f32 %v1191, %v1287
          %v1320 = vadd.f32 %v1192, %v1288
          %v1321 = vadd.f32 %v1193, %v1289
          %v1322 = vadd.f32 %v1194, %v1290
          %v1323 = vadd.f32 %v1195, %v1291
          %v1324 = vadd.f32 %v1196, %v1292
          %v1325 = vadd.f32 %v1197, %v1293
          %v1326 = vadd.f32 %v1198, %v1294
          %v1327 = vadd.f32 %v1199, %v1295
          %v1328 = vadd.f32 %v1200, %v1296
          %v1329 = vadd.f32 %v1201, %v1297
          %v1330 = vadd.f32 %v1202, %v1298
          %v1331 = vadd.f32 %v1203, %v1299
          %v1332 = vadd.f32 %v1204, %v1300
          %v1333 = vadd.f32 %v1205, %v1301
          %v1334 = vadd.f32 %v1206, %v1302
          %v1335 = vadd.f32 %v1207, %v1303
          %v1336 = vadd.f32 %v1208, %v1304
          %v1337 = vadd.f32 %v1209, %v1305
          %v1338 = vadd.f32 %v1210, %v1306
          %v1339 = vadd.f32 %v1211, %v1307
          %v1340 = vadd.f32 %v1212, %v1308
          %v1341 = vadd.f32 %v1213, %v1309
          %v1342 = vadd.f32 %v1214, %v1310
          %v1343 = vadd.f32 %v1215, %v1311
          %v1344 = vadd.f32 %v1216, %v1312
          %v1345 = vadd.f32 %v1217, %v1313
          %v1346 = vmul.f32 %v1314, 0.7978846
          %v1347 = vmul.f32 %v1315, 0.7978846
          %v1348 = vmul.f32 %v1316, 0.7978846
          %v1349 = vmul.f32 %v1317, 0.7978846
          %v1350 = vmul.f32 %v1318, 0.7978846
          %v1351 = vmul.f32 %v1319, 0.7978846
          %v1352 = vmul.f32 %v1320, 0.7978846
          %v1353 = vmul.f32 %v1321, 0.7978846
          %v1354 = vmul.f32 %v1322, 0.7978846
          %v1355 = vmul.f32 %v1323, 0.7978846
          %v1356 = vmul.f32 %v1324, 0.7978846
          %v1357 = vmul.f32 %v1325, 0.7978846
          %v1358 = vmul.f32 %v1326, 0.7978846
          %v1359 = vmul.f32 %v1327, 0.7978846
          %v1360 = vmul.f32 %v1328, 0.7978846
          %v1361 = vmul.f32 %v1329, 0.7978846
          %v1362 = vmul.f32 %v1330, 0.7978846
          %v1363 = vmul.f32 %v1331, 0.7978846
          %v1364 = vmul.f32 %v1332, 0.7978846
          %v1365 = vmul.f32 %v1333, 0.7978846
          %v1366 = vmul.f32 %v1334, 0.7978846
          %v1367 = vmul.f32 %v1335, 0.7978846
          %v1368 = vmul.f32 %v1336, 0.7978846
          %v1369 = vmul.f32 %v1337, 0.7978846
          %v1370 = vmul.f32 %v1338, 0.7978846
          %v1371 = vmul.f32 %v1339, 0.7978846
          %v1372 = vmul.f32 %v1340, 0.7978846
          %v1373 = vmul.f32 %v1341, 0.7978846
          %v1374 = vmul.f32 %v1342, 0.7978846
          %v1375 = vmul.f32 %v1343, 0.7978846
          %v1376 = vmul.f32 %v1344, 0.7978846
          %v1377 = vmul.f32 %v1345, 0.7978846
          %v1378 = vmul.f32 %v1186, 0.5
          %v1379 = vmul.f32 %v1187, 0.5
          %v1380 = vmul.f32 %v1188, 0.5
          %v1381 = vmul.f32 %v1189, 0.5
          %v1382 = vmul.f32 %v1190, 0.5
          %v1383 = vmul.f32 %v1191, 0.5
          %v1384 = vmul.f32 %v1192, 0.5
          %v1385 = vmul.f32 %v1193, 0.5
          %v1386 = vmul.f32 %v1194, 0.5
          %v1387 = vmul.f32 %v1195, 0.5
          %v1388 = vmul.f32 %v1196, 0.5
          %v1389 = vmul.f32 %v1197, 0.5
          %v1390 = vmul.f32 %v1198, 0.5
          %v1391 = vmul.f32 %v1199, 0.5
          %v1392 = vmul.f32 %v1200, 0.5
          %v1393 = vmul.f32 %v1201, 0.5
          %v1394 = vmul.f32 %v1202, 0.5
          %v1395 = vmul.f32 %v1203, 0.5
          %v1396 = vmul.f32 %v1204, 0.5
          %v1397 = vmul.f32 %v1205, 0.5
          %v1398 = vmul.f32 %v1206, 0.5
          %v1399 = vmul.f32 %v1207, 0.5
          %v1400 = vmul.f32 %v1208, 0.5
          %v1401 = vmul.f32 %v1209, 0.5
          %v1402 = vmul.f32 %v1210, 0.5
          %v1403 = vmul.f32 %v1211, 0.5
          %v1404 = vmul.f32 %v1212, 0.5
          %v1405 = vmul.f32 %v1213, 0.5
          %v1406 = vmul.f32 %v1214, 0.5
          %v1407 = vmul.f32 %v1215, 0.5
          %v1408 = vmul.f32 %v1216, 0.5
          %v1409 = vmul.f32 %v1217, 0.5
          %v1410 = vtanh.pop %v1346
          %v1411 = vtanh.pop %v1347
          %v1412 = vtanh.pop %v1348
          %v1413 = vtanh.pop %v1349
          %v1414 = vtanh.pop %v1350
          %v1415 = vtanh.pop %v1351
          %v1416 = vtanh.pop %v1352
          %v1417 = vtanh.pop %v1353
          %v1418 = vtanh.pop %v1354
          %v1419 = vtanh.pop %v1355
          %v1420 = vtanh.pop %v1356
          %v1421 = vtanh.pop %v1357
          %v1422 = vtanh.pop %v1358
          %v1423 = vtanh.pop %v1359
          %v1424 = vtanh.pop %v1360
          %v1425 = vtanh.pop %v1361
          %v1426 = vtanh.pop %v1362
          %v1427 = vtanh.pop %v1363
          %v1428 = vtanh.pop %v1364
          %v1429 = vtanh.pop %v1365
          %v1430 = vtanh.pop %v1366
          %v1431 = vtanh.pop %v1367
          %v1432 = vtanh.pop %v1368
          %v1433 = vtanh.pop %v1369
          %v1434 = vtanh.pop %v1370
          %v1435 = vtanh.pop %v1371
          %v1436 = vtanh.pop %v1372
          %v1437 = vtanh.pop %v1373
          %v1438 = vtanh.pop %v1374
          %v1439 = vtanh.pop %v1375
          %v1440 = vtanh.pop %v1376
          %v1441 = vtanh.pop %v1377
          %v1442 = vadd.f32 %v1410, 1.0
          %v1443 = vadd.f32 %v1411, 1.0
          %v1444 = vadd.f32 %v1412, 1.0
          %v1445 = vadd.f32 %v1413, 1.0
          %v1446 = vadd.f32 %v1414, 1.0
          %v1447 = vadd.f32 %v1415, 1.0
          %v1448 = vadd.f32 %v1416, 1.0
          %v1449 = vadd.f32 %v1417, 1.0
          %v1450 = vadd.f32 %v1418, 1.0
          %v1451 = vadd.f32 %v1419, 1.0
          %v1452 = vadd.f32 %v1420, 1.0
          %v1453 = vadd.f32 %v1421, 1.0
          %v1454 = vadd.f32 %v1422, 1.0
          %v1455 = vadd.f32 %v1423, 1.0
          %v1456 = vadd.f32 %v1424, 1.0
          %v1457 = vadd.f32 %v1425, 1.0
          %v1458 = vadd.f32 %v1426, 1.0
          %v1459 = vadd.f32 %v1427, 1.0
          %v1460 = vadd.f32 %v1428, 1.0
          %v1461 = vadd.f32 %v1429, 1.0
          %v1462 = vadd.f32 %v1430, 1.0
          %v1463 = vadd.f32 %v1431, 1.0
          %v1464 = vadd.f32 %v1432, 1.0
          %v1465 = vadd.f32 %v1433, 1.0
          %v1466 = vadd.f32 %v1434, 1.0
          %v1467 = vadd.f32 %v1435, 1.0
          %v1468 = vadd.f32 %v1436, 1.0
          %v1469 = vadd.f32 %v1437, 1.0
          %v1470 = vadd.f32 %v1438, 1.0
          %v1471 = vadd.f32 %v1439, 1.0
          %v1472 = vadd.f32 %v1440, 1.0
          %v1473 = vadd.f32 %v1441, 1.0
          %v1474 = vmul.f32 %v1378, %v1442
          %v1475 = vmul.f32 %v1379, %v1443
          %v1476 = vmul.f32 %v1380, %v1444
          %v1477 = vmul.f32 %v1381, %v1445
          %v1478 = vmul.f32 %v1382, %v1446
          %v1479 = vmul.f32 %v1383, %v1447
          %v1480 = vmul.f32 %v1384, %v1448
          %v1481 = vmul.f32 %v1385, %v1449
          %v1482 = vmul.f32 %v1386, %v1450
          %v1483 = vmul.f32 %v1387, %v1451
          %v1484 = vmul.f32 %v1388, %v1452
          %v1485 = vmul.f32 %v1389, %v1453
          %v1486 = vmul.f32 %v1390, %v1454
          %v1487 = vmul.f32 %v1391, %v1455
          %v1488 = vmul.f32 %v1392, %v1456
          %v1489 = vmul.f32 %v1393, %v1457
          %v1490 = vmul.f32 %v1394, %v1458
          %v1491 = vmul.f32 %v1395, %v1459
          %v1492 = vmul.f32 %v1396, %v1460
          %v1493 = vmul.f32 %v1397, %v1461
          %v1494 = vmul.f32 %v1398, %v1462
          %v1495 = vmul.f32 %v1399, %v1463
          %v1496 = vmul.f32 %v1400, %v1464
          %v1497 = vmul.f32 %v1401, %v1465
          %v1498 = vmul.f32 %v1402, %v1466
          %v1499 = vmul.f32 %v1403, %v1467
          %v1500 = vmul.f32 %v1404, %v1468
          %v1501 = vmul.f32 %v1405, %v1469
          %v1502 = vmul.f32 %v1406, %v1470
          %v1503 = vmul.f32 %v1407, %v1471
          %v1504 = vmul.f32 %v1408, %v1472
          %v1505 = vmul.f32 %v1409, %v1473
          %1506 = vst [vmem:[%s222] sm:$0xff] %v1474
          %1507 = vst [vmem:[%s222 + $0x8] sm:$0xff] %v1475
          %1508 = vst [vmem:[%s222 + $0x10] sm:$0xff] %v1476
          %1509 = vst [vmem:[%s222 + $0x18] sm:$0xff] %v1477
          %1510 = vst [vmem:[%s222 + $0x20] sm:$0xff] %v1478
          %1511 = vst [vmem:[%s222 + $0x28] sm:$0xff] %v1479
          %1512 = vst [vmem:[%s222 + $0x30] sm:$0xff] %v1480
          %1513 = vst [vmem:[%s222 + $0x38] sm:$0xff] %v1481
          %1514 = vst [vmem:[%s222 + $0x40] sm:$0xff] %v1482
          %1515 = vst [vmem:[%s222 + $0x48] sm:$0xff] %v1483
          %1516 = vst [vmem:[%s222 + $0x50] sm:$0xff] %v1484
          %1517 = vst [vmem:[%s222 + $0x58] sm:$0xff] %v1485
          %1518 = vst [vmem:[%s222 + $0x60] sm:$0xff] %v1486
          %1519 = vst [vmem:[%s222 + $0x68] sm:$0xff] %v1487
          %1520 = vst [vmem:[%s222 + $0x70] sm:$0xff] %v1488
          %1521 = vst [vmem:[%s222 + $0x78] sm:$0xff] %v1489
          %1522 = vst [vmem:[%s222 + $0x80] sm:$0xff] %v1490
          %1523 = vst [vmem:[%s222 + $0x88] sm:$0xff] %v1491
          %1524 = vst [vmem:[%s222 + $0x90] sm:$0xff] %v1492
          %1525 = vst [vmem:[%s222 + $0x98] sm:$0xff] %v1493
          %1526 = vst [vmem:[%s222 + $0xa0] sm:$0xff] %v1494
          %1527 = vst [vmem:[%s222 + $0xa8] sm:$0xff] %v1495
          %1528 = vst [vmem:[%s222 + $0xb0] sm:$0xff] %v1496
          %1529 = vst [vmem:[%s222 + $0xb8] sm:$0xff] %v1497
          %1530 = vst [vmem:[%s222 + $0xc0] sm:$0xff] %v1498
          %1531 = vst [vmem:[%s222 + $0xc8] sm:$0xff] %v1499
          %1532 = vst [vmem:[%s222 + $0xd0] sm:$0xff] %v1500
          %1533 = vst [vmem:[%s222 + $0xd8] sm:$0xff] %v1501
          %1534 = vst [vmem:[%s222 + $0xe0] sm:$0xff] %v1502
          %1535 = vst [vmem:[%s222 + $0xe8] sm:$0xff] %v1503
          %1536 = vst [vmem:[%s222 + $0xf0] sm:$0xff] %v1504
          %1537 = vst [vmem:[%s222 + $0xf8] sm:$0xff] %v1505
        $region48: #{model_forward.1} parent=35 // pred_fallthru
          _
        %s1538 = sand.u32 %s139, 1
        %s1539 = sand.u32 %s139, 1
        %s1540 = smul.addr %s1539, 256
        %s1541 = scalar_lea.vmem [#allocation6], %s1540
        // Predicated region
        $region53: #{model_forward.1} parent=35 // pred_check
          %p1542 = pneg %p149
        $region54: #{model_forward.1} parent=35 // pred_check_branch
          %1544 = sbr.rel (%p1542) target = $region56
        $region55: #{model_forward.1} parent=35 // pred_region
          %s1545 = smul.u32 %s20, %s21
          %s1546 = smul.u32 %s20, %s22
          %s1547 = smul.u32 4, %s1546
          %s1548 = smul.addr %s1545, 64
          %s1549 = sadd.s32 %s1547, %s1548
          %s1550 = smul.addr %s1549, 8
          %s1551 = scalar_lea.vmem %s4, %s1550
          // Predicated region
          $region57: #{model_forward.1} parent=55 // pred_check
            _
          $region58: #{model_forward.1} parent=55 // pred_check_branch
            %1553 = sbr.rel (0) target = $region60
          $region59: #{model_forward.1} parent=55 // pred_region
            // Predicated region
            $region61: #{model_forward.1} parent=59 // pred_check
              _
            $region62: #{model_forward.1} parent=59 // pred_check_branch
              %1555 = sbr.rel (0) target = $region64
            $region63: #{model_forward.1} parent=59 // pred_region
              loop: start=0, step=1, limit=1
              $region65: #{model_forward.1} parent=63 // loop_pre_header
                _
              $region66: #{model_forward.1} parent=63 // loop_header
                %s1557 = sphi 0, %s1561
                %p1558 = scmp.ge.s32.totalorder %s1557, 1
                %s1562 = sphi %s1541, %s1541
                %s1563 = sphi %s1551, %s1551
              $region67: #{model_forward.1} parent=63 // loop_header_branch
                %1560 = sbr.rel (%p1558) target = $region71
              $region68: #{model_forward.1} parent=63 // loop_body
                %v1564 = vld [vmem:[%s1562] sm:$0xff]
                %1565 = vst [vmem:[%s1563] sm:$0xff] %v1564
                %v1566 = vld [vmem:[%s1562 + $0x8] sm:$0xff]
                %1567 = vst [vmem:[%s1563 + $0x8] sm:$0xff] %v1566
                %v1568 = vld [vmem:[%s1562 + $0x10] sm:$0xff]
                %1569 = vst [vmem:[%s1563 + $0x10] sm:$0xff] %v1568
                %v1570 = vld [vmem:[%s1562 + $0x18] sm:$0xff]
                %1571 = vst [vmem:[%s1563 + $0x18] sm:$0xff] %v1570
                %v1572 = vld [vmem:[%s1562 + $0x20] sm:$0xff]
                %1573 = vst [vmem:[%s1563 + $0x40] sm:$0xff] %v1572
                %v1574 = vld [vmem:[%s1562 + $0x28] sm:$0xff]
                %1575 = vst [vmem:[%s1563 + $0x48] sm:$0xff] %v1574
                %v1576 = vld [vmem:[%s1562 + $0x30] sm:$0xff]
                %1577 = vst [vmem:[%s1563 + $0x50] sm:$0xff] %v1576
                %v1578 = vld [vmem:[%s1562 + $0x38] sm:$0xff]
                %1579 = vst [vmem:[%s1563 + $0x58] sm:$0xff] %v1578
                %v1580 = vld [vmem:[%s1562 + $0x40] sm:$0xff]
                %1581 = vst [vmem:[%s1563 + $0x80] sm:$0xff] %v1580
                %v1582 = vld [vmem:[%s1562 + $0x48] sm:$0xff]
                %1583 = vst [vmem:[%s1563 + $0x88] sm:$0xff] %v1582
                %v1584 = vld [vmem:[%s1562 + $0x50] sm:$0xff]
                %1585 = vst [vmem:[%s1563 + $0x90] sm:$0xff] %v1584
                %v1586 = vld [vmem:[%s1562 + $0x58] sm:$0xff]
                %1587 = vst [vmem:[%s1563 + $0x98] sm:$0xff] %v1586
                %v1588 = vld [vmem:[%s1562 + $0x60] sm:$0xff]
                %1589 = vst [vmem:[%s1563 + $0xc0] sm:$0xff] %v1588
                %v1590 = vld [vmem:[%s1562 + $0x68] sm:$0xff]
                %1591 = vst [vmem:[%s1563 + $0xc8] sm:$0xff] %v1590
                %v1592 = vld [vmem:[%s1562 + $0x70] sm:$0xff]
                %1593 = vst [vmem:[%s1563 + $0xd0] sm:$0xff] %v1592
                %v1594 = vld [vmem:[%s1562 + $0x78] sm:$0xff]
                %1595 = vst [vmem:[%s1563 + $0xd8] sm:$0xff] %v1594
                %v1596 = vld [vmem:[%s1562 + $0x80] sm:$0xff]
                %1597 = vst [vmem:[%s1563 + $0x100] sm:$0xff] %v1596
                %v1598 = vld [vmem:[%s1562 + $0x88] sm:$0xff]
                %1599 = vst [vmem:[%s1563 + $0x108] sm:$0xff] %v1598
                %v1600 = vld [vmem:[%s1562 + $0x90] sm:$0xff]
                %1601 = vst [vmem:[%s1563 + $0x110] sm:$0xff] %v1600
                %v1602 = vld [vmem:[%s1562 + $0x98] sm:$0xff]
                %1603 = vst [vmem:[%s1563 + $0x118] sm:$0xff] %v1602
                %v1604 = vld [vmem:[%s1562 + $0xa0] sm:$0xff]
                %1605 = vst [vmem:[%s1563 + $0x140] sm:$0xff] %v1604
                %v1606 = vld [vmem:[%s1562 + $0xa8] sm:$0xff]
                %1607 = vst [vmem:[%s1563 + $0x148] sm:$0xff] %v1606
                %v1608 = vld [vmem:[%s1562 + $0xb0] sm:$0xff]
                %1609 = vst [vmem:[%s1563 + $0x150] sm:$0xff] %v1608
                %v1610 = vld [vmem:[%s1562 + $0xb8] sm:$0xff]
                %1611 = vst [vmem:[%s1563 + $0x158] sm:$0xff] %v1610
                %v1612 = vld [vmem:[%s1562 + $0xc0] sm:$0xff]
                %1613 = vst [vmem:[%s1563 + $0x180] sm:$0xff] %v1612
                %v1614 = vld [vmem:[%s1562 + $0xc8] sm:$0xff]
                %1615 = vst [vmem:[%s1563 + $0x188] sm:$0xff] %v1614
                %v1616 = vld [vmem:[%s1562 + $0xd0] sm:$0xff]
                %1617 = vst [vmem:[%s1563 + $0x190] sm:$0xff] %v1616
                %v1618 = vld [vmem:[%s1562 + $0xd8] sm:$0xff]
                %1619 = vst [vmem:[%s1563 + $0x198] sm:$0xff] %v1618
                %v1620 = vld [vmem:[%s1562 + $0xe0] sm:$0xff]
                %1621 = vst [vmem:[%s1563 + $0x1c0] sm:$0xff] %v1620
                %v1622 = vld [vmem:[%s1562 + $0xe8] sm:$0xff]
                %1623 = vst [vmem:[%s1563 + $0x1c8] sm:$0xff] %v1622
                %v1624 = vld [vmem:[%s1562 + $0xf0] sm:$0xff]
                %1625 = vst [vmem:[%s1563 + $0x1d0] sm:$0xff] %v1624
                %v1626 = vld [vmem:[%s1562 + $0xf8] sm:$0xff]
                %1627 = vst [vmem:[%s1563 + $0x1d8] sm:$0xff] %v1626
              $region69: #{model_forward.1} parent=63 // loop_footer
                %s1561 = sadd.s32 1, %s1557
              $region70: #{model_forward.1} parent=63 // loop_footer_branch
                %1556 = sbr.rel target = $region66
              $region71: #{model_forward.1} parent=63 // loop_exit
                _
            $region64: #{model_forward.1} parent=59 // pred_fallthru
              _
            // Predicated region
            $region72: #{model_forward.1} parent=59 // pred_check
              _
            $region73: #{model_forward.1} parent=59 // pred_check_branch
              %1629 = sbr.rel target = $region75
            $region74: #{model_forward.1} parent=59 // pred_region
              _
            $region75: #{model_forward.1} parent=59 // pred_fallthru
              _
          $region60: #{model_forward.1} parent=55 // pred_fallthru
            _
          %1630 = vnop
        $region56: #{model_forward.1} parent=35 // pred_fallthru
          _
      $region36: #{model_forward.1} parent=5 // pred_fallthru
        _
      %p1631 = scmp.le.s32.totalorder 2, %s10
      // Predicated region
      $region76: #{model_forward.1} parent=5 // pred_check
        %p1632 = pneg %p1631
      $region77: #{model_forward.1} parent=5 // pred_check_branch
        %1634 = sbr.rel (%p1632) target = $region79
      $region78: #{model_forward.1} parent=5 // pred_region
        %s1635 = ssub.s32 %s10, 2
        // Predicated region
        $region80: #{model_forward.1} parent=78 // pred_check
          %p1636 = pneg %p155
        $region81: #{model_forward.1} parent=78 // pred_check_branch
          %1638 = sbr.rel (%p1636) target = $region83
        $region82: #{model_forward.1} parent=78 // pred_region
          %s1639 = sand.u32 %s140, 1
          %s1640 = sand.u32 %s140, 1
          %s1641 = smul.addr %s1640, 256
          %s1642 = scalar_lea.vmem [#allocation6], %s1641
        $region83: #{model_forward.1} parent=78 // pred_fallthru
          _
      $region79: #{model_forward.1} parent=5 // pred_fallthru
        _
    $region6: #{model_forward.1} parent=1 // loop_footer
      %s14 = sadd.s32 1, %s10
    $region7: #{model_forward.1} parent=1 // loop_footer_branch
      %9 = sbr.rel target = $region3
    $region8: #{model_forward.1} parent=1 // loop_exit
      _

</llo_original>
